<compile_context>
chip_gen: v7x
topology: tpu7x:2x2x1
jax: 0.10.0
libtpu: 0.0.40
codegen_flags: <defaults>
</compile_context>

<pallas_src>
import functools

import jax
import jax.numpy as jnp
import numpy as np
from jax.experimental import pallas as pl
from jax.experimental.pallas import tpu as pltpu

EPS = 1e-5
LANE = 128
SUBLANE = 8


def _round_up(x, m):
    return ((x + m - 1) // m) * m


def _cdiv(a, b):
    return (a + b - 1) // b


# --------------------------- weight / BN folding -----------------------------
def _bn_fold(bn):
    gamma, beta, mean, var = bn
    scale = gamma / jnp.sqrt(var + EPS)
    return scale, beta - mean * scale


def _fold_1x1(w_oihw, bn, k_pad, n_pad):
    """(Cout, Cin, 1, 1) -> (k_pad, n_pad) bf16 with BN folded in, + f32 bias."""
    scale, bias = _bn_fold(bn)
    cout, cin = w_oihw.shape[0], w_oihw.shape[1]
    w = jnp.transpose(w_oihw[:, :, 0, 0], (1, 0)) * scale[None, :]     # (Cin, Cout)
    w = jnp.pad(w, ((0, k_pad - cin), (0, n_pad - cout)))
    b = jnp.pad(bias, (0, n_pad - cout))
    return w.astype(jnp.bfloat16), b.reshape(1, n_pad).astype(jnp.float32)


def _fold_3x3_kstack(w_oihw, bn, cmidp):
    """(Cout, Cin, 3, 3) -> K-stacked (9*cmidp, cmidp) bf16, tap t = kh*3 + kw."""
    scale, bias = _bn_fold(bn)
    cout, cin = w_oihw.shape[0], w_oihw.shape[1]
    w = jnp.transpose(w_oihw, (2, 3, 1, 0)) * scale[None, None, None, :]  # (3,3,Cin,Cout)
    w = jnp.pad(w, ((0, 0), (0, 0), (0, cmidp - cin), (0, cmidp - cout)))
    w = w.reshape(9 * cmidp, cmidp)
    b = jnp.pad(bias, (0, cmidp - cout))
    return w.astype(jnp.bfloat16), b.reshape(1, cmidp).astype(jnp.float32)


# ------------------------------ forward wrapper -------------------------------
def bottleneck_forward(x_nchw, params, stride, out_dtype=jnp.bfloat16):
    expansion = 4
    N, Cin, H, W = x_nchw.shape
    Cmid = params["w1"].shape[0]
    Cexp = Cmid * expansion
    has_proj = "ws" in params

    Cinp = _round_up(Cin, LANE)
    Cmidp = _round_up(Cmid, LANE)
    Cexpp = _round_up(Cexp, LANE)

    s = stride
    Ho = (H - 1) // s + 1
    Wo = (W - 1) // s + 1
    # Phase-plane spatial extents (cover the 1-px conv halo + alignment).
    Hs = max(Ho - 1 + _cdiv(3, s), _cdiv(H + 1, s))
    Ws = _round_up(max(Wo - 1 + _cdiv(3, s), _cdiv(W + 1, s)), SUBLANE)
    P = s * s * Hs * Ws
    HoWo = Ho * Wo

    # Single cheap layout pass on the input: NCHW -> NHWC.
    x_nhwc = jnp.transpose(x_nchw, (0, 2, 3, 1))

    # Main-path input: zero-pad (halo + alignment), channel-pad to 128 lanes,
    # space-to-depth by the stride so every 3x3 tap is a unit-stride window.
    xp = jnp.pad(x_nhwc, ((0, 0), (1, s * Hs - H - 1), (1, s * Ws - W - 1),
                          (0, Cinp - Cin)))
    xp = xp.reshape(N, Hs, s, Ws, s, Cinp).transpose(0, 2, 4, 1, 3, 5)
    xp = xp.reshape(N, P, Cinp).astype(jnp.bfloat16)

    # Validity mask (1 = real pixel, 0 = padding), same pixel order.  It re-zeroes
    # conv1's response on padding so the 3x3 sees true zero-padding (conv1's
    # folded bias would otherwise leak into the halo).
    m = jnp.pad(jnp.ones((H, W), jnp.float32),
                ((1, s * Hs - H - 1), (1, s * Ws - W - 1)))
    m = m.reshape(Hs, s, Ws, s).transpose(1, 3, 0, 2).reshape(P, 1)

    # Shortcut input.
    if has_proj:
        # Strided pixel gather done ONCE by XLA, not by an in-kernel matmul.
        xs = x_nhwc[:, ::s, ::s, :][:, :Ho, :Wo, :]
        xs = jnp.pad(xs, ((0, 0), (0, 0), (0, 0), (0, Cinp - Cin)))
        xs = xs.reshape(N, HoWo, Cinp).astype(jnp.bfloat16)
        ws, bs = _fold_1x1(params["ws"], params["bns"], Cinp, Cexpp)
    else:
        # Identity shortcut: channel-padded f32 input added directly (no matmul).
        assert s == 1 and Cin == Cexp
        xs = jnp.pad(x_nhwc, ((0, 0), (0, 0), (0, 0), (0, Cexpp - Cin)))
        xs = xs.reshape(N, HoWo, Cexpp).astype(jnp.float32)
        ws = bs = None

    w1, b1 = _fold_1x1(params["w1"], params["bn1"], Cinp, Cmidp)
    w2, b2 = _fold_3x3_kstack(params["w2"], params["bn2"], Cmidp)
    w3, b3 = _fold_1x1(params["w3"], params["bn3"], Cmidp, Cexpp)

    # --------------------------- the fused kernel ----------------------------
    def kernel(x_ref, m_ref, xs_ref, w1_ref, b1_ref, w2_ref, b2_ref,
               w3_ref, b3_ref, *rest):
        if has_proj:
            ws_ref, bs_ref, o_ref = rest
        else:
            (o_ref,) = rest
        f32, bf16 = jnp.float32, jnp.bfloat16

        # conv1 (1x1) + BN + ReLU over all (padded) pixels, mask zeroes the halo.
        x = x_ref[0]                                              # (P, Cinp) bf16
        y = jnp.dot(x, w1_ref[...], preferred_element_type=f32)
        y = jnp.maximum(y + b1_ref[...], 0.0) * m_ref[...]        # (P, Cmidp) f32

        # conv2 (3x3, stride) + BN + ReLU: nine unit-stride window slices of the
        # phase-decomposed activation, lane-concatenated, one K-stacked matmul.
        y4 = y.reshape(s * s, Hs, Ws, Cmidp)
        wins = []
        for kh in range(3):
            for kw in range(3):
                ph = (kh % s) * s + (kw % s)
                i0, j0 = kh // s, kw // s
                win = y4[ph, i0:i0 + Ho, j0:j0 + Wo, :]           # (Ho, Wo, Cmidp)
                wins.append(win.reshape(HoWo, Cmidp))
        patches = jnp.concatenate(wins, axis=-1).astype(bf16)     # (HoWo, 9*Cmidp)
        y2 = jnp.dot(patches, w2_ref[...], preferred_element_type=f32)
        y2 = jnp.maximum(y2 + b2_ref[...], 0.0).astype(bf16)      # (HoWo, Cmidp)

        # conv3 (1x1 expansion) + BN.
        res = jnp.dot(y2, w3_ref[...], preferred_element_type=f32) + b3_ref[...]

        # Shortcut: projection matmul on the pre-strided input, or f32 identity add.
        if has_proj:
            sc = jnp.dot(xs_ref[0], ws_ref[...],
                         preferred_element_type=f32) + bs_ref[...]
        else:
            sc = xs_ref[0]                                        # f32, exact skip

        # Residual add + final ReLU in f32 on the VPU; cast once on the store.
        o_ref[0] = jnp.maximum(res + sc, 0.0).astype(o_ref.dtype)

    in_specs = [
        pl.BlockSpec((1, P, Cinp), lambda b: (b, 0, 0)),          # x (space-to-depth)
        pl.BlockSpec((P, 1), lambda b: (0, 0)),                   # halo mask
        pl.BlockSpec((1, HoWo, xs.shape[-1]), lambda b: (b, 0, 0)),  # shortcut input
        pl.BlockSpec((Cinp, Cmidp), lambda b: (0, 0)),            # w1 (BN folded)
        pl.BlockSpec((1, Cmidp), lambda b: (0, 0)),               # b1
        pl.BlockSpec((9 * Cmidp, Cmidp), lambda b: (0, 0)),       # w2 (K-stacked)
        pl.BlockSpec((1, Cmidp), lambda b: (0, 0)),               # b2
        pl.BlockSpec((Cmidp, Cexpp), lambda b: (0, 0)),           # w3
        pl.BlockSpec((1, Cexpp), lambda b: (0, 0)),               # b3
    ]
    inputs = [xp, m, xs, w1, b1, w2, b2, w3, b3]
    if has_proj:
        in_specs += [pl.BlockSpec((Cinp, Cexpp), lambda b: (0, 0)),   # ws
                     pl.BlockSpec((1, Cexpp), lambda b: (0, 0))]      # bs
        inputs += [ws, bs]

    out_itemsize = jnp.dtype(out_dtype).itemsize
    flops = 2 * N * (P * Cinp * Cmidp
                     + HoWo * (9 * Cmidp) * Cmidp
                     + HoWo * Cmidp * Cexpp
                     + (HoWo * Cinp * Cexpp if has_proj else 0))
    bytes_accessed = int(
        xp.size * 2 + m.size * 4 + xs.size * xs.dtype.itemsize
        + (w1.size + w2.size + w3.size) * 2
        + (b1.size + b2.size + b3.size) * 4
        + ((ws.size * 2 + bs.size * 4) if has_proj else 0)
        + N * HoWo * Cexpp * out_itemsize)

    # VMEM limit sized from actual per-step buffers (not the fixed 32 MiB default),
    # capped below v7x's 64 MiB; v5e/v6e (128 MiB) are never bound by this cap here.
    per_step_bytes = (
        2 * P * Cinp * 2                                          # x (double-buffered)
        + 2 * HoWo * xs.shape[-1] * xs.dtype.itemsize             # shortcut
        + 2 * HoWo * Cexpp * out_itemsize                         # output
        + m.size * 4
        + (w1.size + w2.size + w3.size + (ws.size if has_proj else 0)) * 2
        + (b1.size + b2.size + b3.size + (bs.size if has_proj else 0)) * 4
        + 3 * P * Cmidp * 4)                                      # f32 intermediates
    vmem_limit = int(min(max(2 * per_step_bytes, 16 * 2 ** 20), 56 * 2 ** 20))

    out = pl.pallas_call(
        kernel,
        out_shape=jax.ShapeDtypeStruct((N, HoWo, Cexpp), out_dtype),
        grid_spec=pltpu.PrefetchScalarGridSpec(
            num_scalar_prefetch=0,
            grid=(N,),
            in_specs=in_specs,
            out_specs=pl.BlockSpec((1, HoWo, Cexpp), lambda b: (b, 0, 0)),
        ),
        compiler_params=pltpu.CompilerParams(
            dimension_semantics=("parallel",),
            vmem_limit_bytes=vmem_limit),
        cost_estimate=pl.CostEstimate(flops=flops, transcendentals=0,
                                      bytes_accessed=bytes_accessed),
    )(*inputs)

    out = out[:, :, :Cexp].reshape(N, Ho, Wo, Cexp)
    return jnp.transpose(out, (0, 3, 1, 2))   # NCHW


# --------------------------- pure-JAX reference -------------------------------
def _ref_forward(x_nchw, params, stride):
    def conv(x, w, s=1, pad=0):
        return jax.lax.conv_general_dilated(
            x, w, window_strides=(s, s), padding=[(pad, pad), (pad, pad)],
            dimension_numbers=("NCHW", "OIHW", "NCHW"),
            precision=jax.lax.Precision.HIGHEST)

    def bn(x, p):
        g, b, m, v = p
        sc = g / jnp.sqrt(v + EPS)
        return x * sc[None, :, None, None] + (b - m * sc)[None, :, None, None]

    y = jax.nn.relu(bn(conv(x_nchw, params["w1"]), params["bn1"]))
    y = jax.nn.relu(bn(conv(y, params["w2"], stride, 1), params["bn2"]))
    y = bn(conv(y, params["w3"]), params["bn3"])
    Cexp = params["w3"].shape[0]
    if stride != 1 or x_nchw.shape[1] != Cexp:
        sc = bn(conv(x_nchw, params["ws"], stride, 0), params["bns"])
    else:
        sc = x_nchw
    return jax.nn.relu(y + sc)


# ------------------------------- params ---------------------------------------
def init_params(key, in_channels, out_channels, stride):
    expansion = 4
    cexp = out_channels * expansion

    def bn_params(k, c):
        k1, k2, k3, k4 = jax.random.split(k, 4)
        gamma = 1.0 + 0.1 * jax.random.normal(k1, (c,), jnp.float32)
        beta = 0.1 * jax.random.normal(k2, (c,), jnp.float32)
        mean = 0.1 * jax.random.normal(k3, (c,), jnp.float32)
        var = 1.0 + 0.1 * jnp.abs(jax.random.normal(k4, (c,), jnp.float32))
        return (gamma, beta, mean, var)

    keys = jax.random.split(key, 8)
    params = {
        "w1": 0.1 * jax.random.normal(keys[0], (out_channels, in_channels, 1, 1), jnp.float32),
        "bn1": bn_params(keys[1], out_channels),
        "w2": 0.1 * jax.random.normal(keys[2], (out_channels, out_channels, 3, 3), jnp.float32),
        "bn2": bn_params(keys[3], out_channels),
        "w3": 0.1 * jax.random.normal(keys[4], (cexp, out_channels, 1, 1), jnp.float32),
        "bn3": bn_params(keys[5], cexp),
    }
    if stride != 1 or in_channels != cexp:
        params["ws"] = 0.1 * jax.random.normal(keys[6], (cexp, in_channels, 1, 1), jnp.float32)
        params["bns"] = bn_params(keys[7], cexp)
    return params


# --------------------------------- main ----------------------------------------
if __name__ == "__main__":
    # BatchNorm runs in eval/inference mode (running stats folded into the convs).
    key = jax.random.PRNGKey(0)

    configs = [
        # (batch, in_channels, out_channels, spatial, stride)
        (2, 16, 8, 16, 2),    # projection shortcut, stride 2
        (2, 32, 8, 8, 1),     # identity shortcut (in == out*expansion, stride 1)
    ]
    for (batch, cin, cout, spatial, stride) in configs:
        key, kx, kp = jax.random.split(key, 3)
        x = jax.random.normal(kx, (batch, cin, spatial, spatial), jnp.float32)
        params = init_params(kp, cin, cout, stride)

        fwd = jax.jit(functools.partial(bottleneck_forward, stride=stride))
        out = jax.block_until_ready(fwd(x, params))

        ref = jax.block_until_ready(_ref_forward(x, params, stride))
        np.testing.assert_allclose(np.asarray(out.astype(jnp.float32)),
                                   np.asarray(ref), rtol=2e-2, atol=3e-2)

    print("KERNEL_OK")
</pallas_src>

<mosaic_0001>
module attributes {stable_mosaic.version = 11 : i64} {
  func.func @kernel(%arg0: i32, %arg1: memref<1x576x128xbf16, #tpu.memory_space<vmem>>, %arg2: memref<576x1xf32, #tpu.memory_space<vmem>>, %arg3: memref<1x64x128xbf16, #tpu.memory_space<vmem>>, %arg4: memref<128x128xbf16, #tpu.memory_space<vmem>>, %arg5: memref<1x128xf32, #tpu.memory_space<vmem>>, %arg6: memref<1152x128xbf16, #tpu.memory_space<vmem>>, %arg7: memref<1x128xf32, #tpu.memory_space<vmem>>, %arg8: memref<128x128xbf16, #tpu.memory_space<vmem>>, %arg9: memref<1x128xf32, #tpu.memory_space<vmem>>, %arg10: memref<128x128xbf16, #tpu.memory_space<vmem>>, %arg11: memref<1x128xf32, #tpu.memory_space<vmem>>, %arg12: memref<1x64x128xbf16, #tpu.memory_space<vmem>>) attributes {dimension_semantics = [#tpu.dimension_semantics<parallel>], iteration_bounds = array<i64: 2>, scalar_prefetch = 0 : i64, scratch_operands = 0 : i64, tpu.core_type = #tpu.core_type<tc>, window_params = [{transform_indices = @transform_0, window_bounds = array<i64: 1, 576, 128>}, {pipeline_mode = #tpu.pipeline_mode<synchronous>, transform_indices = @transform_1, window_bounds = array<i64: 576, 1>}, {transform_indices = @transform_2, window_bounds = array<i64: 1, 64, 128>}, {pipeline_mode = #tpu.pipeline_mode<synchronous>, transform_indices = @transform_3, window_bounds = array<i64: 128, 128>}, {pipeline_mode = #tpu.pipeline_mode<synchronous>, transform_indices = @transform_4, window_bounds = array<i64: 1, 128>}, {pipeline_mode = #tpu.pipeline_mode<synchronous>, transform_indices = @transform_5, window_bounds = array<i64: 1152, 128>}, {pipeline_mode = #tpu.pipeline_mode<synchronous>, transform_indices = @transform_6, window_bounds = array<i64: 1, 128>}, {pipeline_mode = #tpu.pipeline_mode<synchronous>, transform_indices = @transform_7, window_bounds = array<i64: 128, 128>}, {pipeline_mode = #tpu.pipeline_mode<synchronous>, transform_indices = @transform_8, window_bounds = array<i64: 1, 128>}, {pipeline_mode = #tpu.pipeline_mode<synchronous>, transform_indices = @transform_9, window_bounds = array<i64: 128, 128>}, {pipeline_mode = #tpu.pipeline_mode<synchronous>, transform_indices = @transform_10, window_bounds = array<i64: 1, 128>}, {transform_indices = @transform_11, window_bounds = array<i64: 1, 64, 128>}]} {
    %c0 = arith.constant 0 : index
    %c0_0 = arith.constant 0 : index
    %c0_1 = arith.constant 0 : index
    %0 = vector.load %arg1[%c0, %c0_0, %c0_1] : memref<1x576x128xbf16, #tpu.memory_space<vmem>>, vector<1x576x128xbf16>
    %1 = vector.shape_cast %0 : vector<1x576x128xbf16> to vector<576x128xbf16>
    %c0_2 = arith.constant 0 : index
    %c0_3 = arith.constant 0 : index
    %2 = vector.load %arg4[%c0_2, %c0_3] : memref<128x128xbf16, #tpu.memory_space<vmem>>, vector<128x128xbf16>
    %cst = arith.constant dense<0.000000e+00> : vector<576x128xf32>
    %3 = tpu.matmul %1, %2, %cst {dimension_numbers = #tpu.dot_dimension_numbers<[1], [0], [0], [1], [0, 0, 1, 1], [], []>} : vector<576x128xbf16>, vector<128x128xbf16>, vector<576x128xf32> -> vector<576x128xf32>
    %c0_4 = arith.constant 0 : index
    %c0_5 = arith.constant 0 : index
    %4 = vector.load %arg5[%c0_4, %c0_5] : memref<1x128xf32, #tpu.memory_space<vmem>>, vector<1x128xf32>
    %5 = vector.broadcast %4 : vector<1x128xf32> to vector<576x128xf32>
    %6 = arith.addf %3, %5 : vector<576x128xf32>
    %cst_6 = arith.constant 0.000000e+00 : f32
    %7 = vector.broadcast %cst_6 : f32 to vector<576x128xf32>
    %8 = arith.maximumf %6, %7 : vector<576x128xf32>
    %c0_7 = arith.constant 0 : index
    %c0_8 = arith.constant 0 : index
    %9 = vector.load %arg2[%c0_7, %c0_8] : memref<576x1xf32, #tpu.memory_space<vmem>>, vector<576x1xf32>
    %10 = vector.broadcast %9 : vector<576x1xf32> to vector<576x128xf32>
    %11 = arith.mulf %8, %10 : vector<576x128xf32>
    %12 = vector.shape_cast %11 : vector<576x128xf32> to vector<4x9x16x128xf32>
    %13 = vector.extract_strided_slice %12 {offsets = [0, 0, 0, 0], sizes = [1, 8, 8, 128], strides = [1, 1, 1, 1]} : vector<4x9x16x128xf32> to vector<1x8x8x128xf32>
    %14 = vector.shape_cast %13 : vector<1x8x8x128xf32> to vector<8x8x128xf32>
    %15 = vector.shape_cast %14 : vector<8x8x128xf32> to vector<64x128xf32>
    %16 = vector.extract_strided_slice %12 {offsets = [1, 0, 0, 0], sizes = [1, 8, 8, 128], strides = [1, 1, 1, 1]} : vector<4x9x16x128xf32> to vector<1x8x8x128xf32>
    %17 = vector.shape_cast %16 : vector<1x8x8x128xf32> to vector<8x8x128xf32>
    %18 = vector.shape_cast %17 : vector<8x8x128xf32> to vector<64x128xf32>
    %19 = vector.extract_strided_slice %12 {offsets = [0, 0, 1, 0], sizes = [1, 8, 8, 128], strides = [1, 1, 1, 1]} : vector<4x9x16x128xf32> to vector<1x8x8x128xf32>
    %20 = vector.shape_cast %19 : vector<1x8x8x128xf32> to vector<8x8x128xf32>
    %21 = vector.shape_cast %20 : vector<8x8x128xf32> to vector<64x128xf32>
    %22 = vector.extract_strided_slice %12 {offsets = [2, 0, 0, 0], sizes = [1, 8, 8, 128], strides = [1, 1, 1, 1]} : vector<4x9x16x128xf32> to vector<1x8x8x128xf32>
    %23 = vector.shape_cast %22 : vector<1x8x8x128xf32> to vector<8x8x128xf32>
    %24 = vector.shape_cast %23 : vector<8x8x128xf32> to vector<64x128xf32>
    %25 = vector.extract_strided_slice %12 {offsets = [3, 0, 0, 0], sizes = [1, 8, 8, 128], strides = [1, 1, 1, 1]} : vector<4x9x16x128xf32> to vector<1x8x8x128xf32>
    %26 = vector.shape_cast %25 : vector<1x8x8x128xf32> to vector<8x8x128xf32>
    %27 = vector.shape_cast %26 : vector<8x8x128xf32> to vector<64x128xf32>
    %28 = vector.extract_strided_slice %12 {offsets = [2, 0, 1, 0], sizes = [1, 8, 8, 128], strides = [1, 1, 1, 1]} : vector<4x9x16x128xf32> to vector<1x8x8x128xf32>
    %29 = vector.shape_cast %28 : vector<1x8x8x128xf32> to vector<8x8x128xf32>
    %30 = vector.shape_cast %29 : vector<8x8x128xf32> to vector<64x128xf32>
    %31 = vector.extract_strided_slice %12 {offsets = [0, 1, 0, 0], sizes = [1, 8, 8, 128], strides = [1, 1, 1, 1]} : vector<4x9x16x128xf32> to vector<1x8x8x128xf32>
    %32 = vector.shape_cast %31 : vector<1x8x8x128xf32> to vector<8x8x128xf32>
    %33 = vector.shape_cast %32 : vector<8x8x128xf32> to vector<64x128xf32>
    %34 = vector.extract_strided_slice %12 {offsets = [1, 1, 0, 0], sizes = [1, 8, 8, 128], strides = [1, 1, 1, 1]} : vector<4x9x16x128xf32> to vector<1x8x8x128xf32>
    %35 = vector.shape_cast %34 : vector<1x8x8x128xf32> to vector<8x8x128xf32>
    %36 = vector.shape_cast %35 : vector<8x8x128xf32> to vector<64x128xf32>
    %37 = vector.extract_strided_slice %12 {offsets = [0, 1, 1, 0], sizes = [1, 8, 8, 128], strides = [1, 1, 1, 1]} : vector<4x9x16x128xf32> to vector<1x8x8x128xf32>
    %38 = vector.shape_cast %37 : vector<1x8x8x128xf32> to vector<8x8x128xf32>
    %39 = vector.shape_cast %38 : vector<8x8x128xf32> to vector<64x128xf32>
    %40 = tpu.concatenate %15, %18, %21, %24, %27, %30, %33, %36, %39 in 1 : vector<64x128xf32>, vector<64x128xf32>, vector<64x128xf32>, vector<64x128xf32>, vector<64x128xf32>, vector<64x128xf32>, vector<64x128xf32>, vector<64x128xf32>, vector<64x128xf32> -> vector<64x1152xf32>
    %41 = arith.truncf %40 : vector<64x1152xf32> to vector<64x1152xbf16>
    %c0_9 = arith.constant 0 : index
    %c0_10 = arith.constant 0 : index
    %42 = vector.load %arg6[%c0_9, %c0_10] : memref<1152x128xbf16, #tpu.memory_space<vmem>>, vector<1152x128xbf16>
    %cst_11 = arith.constant dense<0.000000e+00> : vector<64x128xf32>
    %43 = tpu.matmul %41, %42, %cst_11 {dimension_numbers = #tpu.dot_dimension_numbers<[1], [0], [0], [1], [0, 0, 1, 1], [], []>} : vector<64x1152xbf16>, vector<1152x128xbf16>, vector<64x128xf32> -> vector<64x128xf32>
    %c0_12 = arith.constant 0 : index
    %c0_13 = arith.constant 0 : index
    %44 = vector.load %arg7[%c0_12, %c0_13] : memref<1x128xf32, #tpu.memory_space<vmem>>, vector<1x128xf32>
    %45 = vector.broadcast %44 : vector<1x128xf32> to vector<64x128xf32>
    %46 = arith.addf %43, %45 : vector<64x128xf32>
    %cst_14 = arith.constant 0.000000e+00 : f32
    %47 = vector.broadcast %cst_14 : f32 to vector<64x128xf32>
    %48 = arith.maximumf %46, %47 : vector<64x128xf32>
    %49 = arith.truncf %48 : vector<64x128xf32> to vector<64x128xbf16>
    %c0_15 = arith.constant 0 : index
    %c0_16 = arith.constant 0 : index
    %50 = vector.load %arg8[%c0_15, %c0_16] : memref<128x128xbf16, #tpu.memory_space<vmem>>, vector<128x128xbf16>
    %cst_17 = arith.constant dense<0.000000e+00> : vector<64x128xf32>
    %51 = tpu.matmul %49, %50, %cst_17 {dimension_numbers = #tpu.dot_dimension_numbers<[1], [0], [0], [1], [0, 0, 1, 1], [], []>} : vector<64x128xbf16>, vector<128x128xbf16>, vector<64x128xf32> -> vector<64x128xf32>
    %c0_18 = arith.constant 0 : index
    %c0_19 = arith.constant 0 : index
    %52 = vector.load %arg9[%c0_18, %c0_19] : memref<1x128xf32, #tpu.memory_space<vmem>>, vector<1x128xf32>
    %53 = vector.broadcast %52 : vector<1x128xf32> to vector<64x128xf32>
    %54 = arith.addf %51, %53 : vector<64x128xf32>
    %c0_20 = arith.constant 0 : index
    %c0_21 = arith.constant 0 : index
    %c0_22 = arith.constant 0 : index
    %55 = vector.load %arg3[%c0_20, %c0_21, %c0_22] : memref<1x64x128xbf16, #tpu.memory_space<vmem>>, vector<1x64x128xbf16>
    %56 = vector.shape_cast %55 : vector<1x64x128xbf16> to vector<64x128xbf16>
    %c0_23 = arith.constant 0 : index
    %c0_24 = arith.constant 0 : index
    %57 = vector.load %arg10[%c0_23, %c0_24] : memref<128x128xbf16, #tpu.memory_space<vmem>>, vector<128x128xbf16>
    %cst_25 = arith.constant dense<0.000000e+00> : vector<64x128xf32>
    %58 = tpu.matmul %56, %57, %cst_25 {dimension_numbers = #tpu.dot_dimension_numbers<[1], [0], [0], [1], [0, 0, 1, 1], [], []>} : vector<64x128xbf16>, vector<128x128xbf16>, vector<64x128xf32> -> vector<64x128xf32>
    %c0_26 = arith.constant 0 : index
    %c0_27 = arith.constant 0 : index
    %59 = vector.load %arg11[%c0_26, %c0_27] : memref<1x128xf32, #tpu.memory_space<vmem>>, vector<1x128xf32>
    %60 = vector.broadcast %59 : vector<1x128xf32> to vector<64x128xf32>
    %61 = arith.addf %58, %60 : vector<64x128xf32>
    %62 = arith.addf %54, %61 : vector<64x128xf32>
    %cst_28 = arith.constant 0.000000e+00 : f32
    %63 = vector.broadcast %cst_28 : f32 to vector<64x128xf32>
    %64 = arith.maximumf %62, %63 : vector<64x128xf32>
    %65 = arith.truncf %64 : vector<64x128xf32> to vector<64x128xbf16>
    %c0_29 = arith.constant 0 : index
    %c0_30 = arith.constant 0 : index
    %c0_31 = arith.constant 0 : index
    %66 = vector.load %arg12[%c0_29, %c0_30, %c0_31] : memref<1x64x128xbf16, #tpu.memory_space<vmem>>, vector<1x64x128xbf16>
    %67 = vector.shape_cast %66 : vector<1x64x128xbf16> to vector<64x128xbf16>
    %68 = vector.shape_cast %65 : vector<64x128xbf16> to vector<1x64x128xbf16>
    tpu.vector_store %arg12[%c0_29, %c0_30, %c0_31], %68 {strides = array<i32>} : memref<1x64x128xbf16, #tpu.memory_space<vmem>>, vector<1x64x128xbf16>,
    return
  }
  func.func @transform_0(%arg0: i32) -> (i32, i32, i32) {
    %c0_i32 = arith.constant 0 : i32
    %c0_i32_0 = arith.constant 0 : i32
    %c0_i32_1 = arith.constant 0 : i32
    return %arg0, %c0_i32, %c0_i32_0 : i32, i32, i32
  }
  func.func @transform_1(%arg0: i32) -> (i32, i32) {
    %c0_i32 = arith.constant 0 : i32
    %c0_i32_0 = arith.constant 0 : i32
    %c0_i32_1 = arith.constant 0 : i32
    return %c0_i32, %c0_i32_0 : i32, i32
  }
  func.func @transform_2(%arg0: i32) -> (i32, i32, i32) {
    %c0_i32 = arith.constant 0 : i32
    %c0_i32_0 = arith.constant 0 : i32
    %c0_i32_1 = arith.constant 0 : i32
    return %arg0, %c0_i32, %c0_i32_0 : i32, i32, i32
  }
  func.func @transform_3(%arg0: i32) -> (i32, i32) {
    %c0_i32 = arith.constant 0 : i32
    %c0_i32_0 = arith.constant 0 : i32
    %c0_i32_1 = arith.constant 0 : i32
    return %c0_i32, %c0_i32_0 : i32, i32
  }
  func.func @transform_4(%arg0: i32) -> (i32, i32) {
    %c0_i32 = arith.constant 0 : i32
    %c0_i32_0 = arith.constant 0 : i32
    %c0_i32_1 = arith.constant 0 : i32
    return %c0_i32, %c0_i32_0 : i32, i32
  }
  func.func @transform_5(%arg0: i32) -> (i32, i32) {
    %c0_i32 = arith.constant 0 : i32
    %c0_i32_0 = arith.constant 0 : i32
    %c0_i32_1 = arith.constant 0 : i32
    return %c0_i32, %c0_i32_0 : i32, i32
  }
  func.func @transform_6(%arg0: i32) -> (i32, i32) {
    %c0_i32 = arith.constant 0 : i32
    %c0_i32_0 = arith.constant 0 : i32
    %c0_i32_1 = arith.constant 0 : i32
    return %c0_i32, %c0_i32_0 : i32, i32
  }
  func.func @transform_7(%arg0: i32) -> (i32, i32) {
    %c0_i32 = arith.constant 0 : i32
    %c0_i32_0 = arith.constant 0 : i32
    %c0_i32_1 = arith.constant 0 : i32
    return %c0_i32, %c0_i32_0 : i32, i32
  }
  func.func @transform_8(%arg0: i32) -> (i32, i32) {
    %c0_i32 = arith.constant 0 : i32
    %c0_i32_0 = arith.constant 0 : i32
    %c0_i32_1 = arith.constant 0 : i32
    return %c0_i32, %c0_i32_0 : i32, i32
  }
  func.func @transform_9(%arg0: i32) -> (i32, i32) {
    %c0_i32 = arith.constant 0 : i32
    %c0_i32_0 = arith.constant 0 : i32
    %c0_i32_1 = arith.constant 0 : i32
    return %c0_i32, %c0_i32_0 : i32, i32
  }
  func.func @transform_10(%arg0: i32) -> (i32, i32) {
    %c0_i32 = arith.constant 0 : i32
    %c0_i32_0 = arith.constant 0 : i32
    %c0_i32_1 = arith.constant 0 : i32
    return %c0_i32, %c0_i32_0 : i32, i32
  }
  func.func @transform_11(%arg0: i32) -> (i32, i32, i32) {
    %c0_i32 = arith.constant 0 : i32
    %c0_i32_0 = arith.constant 0 : i32
    %c0_i32_1 = arith.constant 0 : i32
    return %arg0, %c0_i32, %c0_i32_0 : i32, i32, i32
  }
}

</mosaic_0001>

<llo_original>
// kernel: bottleneck_forward.1
$region0: #{bottleneck_forward.1}
  #allocation0 [shape = 'u32[]', space=smem, size = 0x4, offset = 0x4, fixed_abs, tag = 'smem constant byte address 0x4 - core index']
  #allocation1 [shape = 'u32[144,128]{1,0:T(1,128)}', space=vmem, size = 0x12000, scoped, tag = 'internal scratch']
  %s0 = inlined_call_operand.vmem [shape: bf16[2,576,128], index: 0, kind: input, shape index: {}]
  %s1 = inlined_call_operand.vmem [shape: f32[576,1], index: 1, kind: input, shape index: {}]
  %s2 = inlined_call_operand.vmem [shape: bf16[2,64,128], index: 2, kind: input, shape index: {}]
  %s3 = inlined_call_operand.vmem [shape: bf16[128,128], index: 3, kind: input, shape index: {}]
  %s4 = inlined_call_operand.vmem [shape: f32[1,128], index: 4, kind: input, shape index: {}]
  %s5 = inlined_call_operand.vmem [shape: bf16[1152,128], index: 5, kind: input, shape index: {}]
  %s6 = inlined_call_operand.vmem [shape: f32[1,128], index: 6, kind: input, shape index: {}]
  %s7 = inlined_call_operand.vmem [shape: bf16[128,128], index: 7, kind: input, shape index: {}]
  %s8 = inlined_call_operand.vmem [shape: f32[1,128], index: 8, kind: input, shape index: {}]
  %s9 = inlined_call_operand.vmem [shape: bf16[128,128], index: 9, kind: input, shape index: {}]
  %s10 = inlined_call_operand.vmem [shape: f32[1,128], index: 10, kind: input, shape index: {}]
  %s11 = inlined_call_operand.vmem [shape: bf16[2,64,128], index: 11, kind: output, shape index: {}]
  %s12 = sld [smem:[#allocation0]]
  $region77: #{bottleneck_forward.1} parent=0
    _
  %s14 = ssub.s32 1, %s12
  %s15 = scalar_select 0, %s14, %s12
  loop: start=0, step=1, limit=4
  $region2: #{bottleneck_forward.1} parent=0 // loop_pre_header
    _
  $region3: #{bottleneck_forward.1} parent=0 // loop_header
    %s17 = sphi 0, %s21
    %p18 = scmp.ge.s32.totalorder %s17, 4
    %s27 = sphi 0, %s29
    %s30 = sphi 0, %s27
    %s31 = sphi 0, %s30
    %s47 = sphi 0, %s31
    %s51 = sphi 0, %s51
    %s53 = sphi 0, %s51
    %s54 = sphi 0, %s53
    %s68 = sphi 0, %s54
    %s74 = sphi 0, %s76
    %s77 = sphi 0, %s74
    %s78 = sphi 0, %s77
    %s94 = sphi 0, %s78
    %s98 = sphi 0, %s98
    %s100 = sphi 0, %s98
    %s101 = sphi 0, %s100
    %s115 = sphi 0, %s101
    %s119 = sphi 0, %s119
    %s121 = sphi 0, %s119
    %s122 = sphi 0, %s121
    %s136 = sphi 0, %s122
    %s140 = sphi 0, %s140
    %s142 = sphi 0, %s140
    %s143 = sphi 0, %s142
    %s157 = sphi 0, %s143
    %s161 = sphi 0, %s161
    %s163 = sphi 0, %s161
    %s164 = sphi 0, %s163
    %s178 = sphi 0, %s164
    %s182 = sphi 0, %s182
    %s184 = sphi 0, %s182
    %s185 = sphi 0, %s184
    %s199 = sphi 0, %s185
    %s203 = sphi 0, %s203
    %s205 = sphi 0, %s203
    %s206 = sphi 0, %s205
    %s220 = sphi 0, %s206
    %s224 = sphi 0, %s224
    %s226 = sphi 0, %s224
    %s227 = sphi 0, %s226
    %s241 = sphi 0, %s227
    %s245 = sphi 0, %s245
    %s247 = sphi 0, %s245
    %s248 = sphi 0, %s247
    %s262 = sphi 0, %s248
    %s268 = sphi 0, %s270
    %s271 = sphi 0, %s268
    %s272 = sphi 0, %s271
    %s288 = sphi 0, %s272
  $region4: #{bottleneck_forward.1} parent=0 // loop_header_branch
    %20 = sbr.rel (%p18) target = $region8
  $region5: #{bottleneck_forward.1} parent=0 // loop_body
    %s22 = ssub.s32 %s17, 1
    %s23 = ssub.s32 %s17, 2
    %s24 = sadd.s32 %s17, 1
    %s25 = ssub.s32 %s17, %s24
    %p26 = scmp.eq.s32.totalorder %s25, 0
    %s28 = sadd.s32 %s27, 1
    %s29 = scalar_select %p26, %s27, %s28
    %p32 = pneg %p26
    %p33 = scmp.eq.s32.totalorder %s17, 1
    %p34 = por %p32, %p33
    %p35 = scmp.ne.s32.totalorder %s27, %s30
    %p36 = scmp.eq.s32.totalorder %s17, 0
    %p37 = por %p35, %p36
    %p38 = scmp.ne.s32.totalorder %s27, %s30
    %p39 = scmp.eq.s32.totalorder %s22, 1
    %p40 = por %p38, %p39
    %p41 = scmp.ne.s32.totalorder %s30, %s31
    %p42 = scmp.eq.s32.totalorder %s22, 0
    %p43 = por %p41, %p42
    %p44 = scmp.ne.s32.totalorder %s30, %s31
    %p45 = scmp.eq.s32.totalorder %s23, 1
    %p46 = por %p44, %p45
    %p48 = scmp.ne.s32.totalorder %s31, %s47
    %p49 = scmp.eq.s32.totalorder %s23, 0
    %p50 = por %p48, %p49
    %s52 = sadd.s32 %s51, 1
    %p55 = scmp.eq.s32.totalorder %s17, 1
    %p56 = scmp.ne.s32.totalorder %s51, %s53
    %p57 = scmp.eq.s32.totalorder %s17, 0
    %p58 = por %p56, %p57
    %p59 = scmp.ne.s32.totalorder %s51, %s53
    %p60 = scmp.eq.s32.totalorder %s22, 1
    %p61 = por %p59, %p60
    %p62 = scmp.ne.s32.totalorder %s53, %s54
    %p63 = scmp.eq.s32.totalorder %s22, 0
    %p64 = por %p62, %p63
    %p65 = scmp.ne.s32.totalorder %s53, %s54
    %p66 = scmp.eq.s32.totalorder %s23, 1
    %p67 = por %p65, %p66
    %p69 = scmp.ne.s32.totalorder %s54, %s68
    %p70 = scmp.eq.s32.totalorder %s23, 0
    %p71 = por %p69, %p70
    %s72 = ssub.s32 %s17, %s24
    %p73 = scmp.eq.s32.totalorder %s72, 0
    %s75 = sadd.s32 %s74, 1
    %s76 = scalar_select %p73, %s74, %s75
    %p79 = pneg %p73
    %p80 = scmp.eq.s32.totalorder %s17, 1
    %p81 = por %p79, %p80
    %p82 = scmp.ne.s32.totalorder %s74, %s77
    %p83 = scmp.eq.s32.totalorder %s17, 0
    %p84 = por %p82, %p83
    %p85 = scmp.ne.s32.totalorder %s74, %s77
    %p86 = scmp.eq.s32.totalorder %s22, 1
    %p87 = por %p85, %p86
    %p88 = scmp.ne.s32.totalorder %s77, %s78
    %p89 = scmp.eq.s32.totalorder %s22, 0
    %p90 = por %p88, %p89
    %p91 = scmp.ne.s32.totalorder %s77, %s78
    %p92 = scmp.eq.s32.totalorder %s23, 1
    %p93 = por %p91, %p92
    %p95 = scmp.ne.s32.totalorder %s78, %s94
    %p96 = scmp.eq.s32.totalorder %s23, 0
    %p97 = por %p95, %p96
    %s99 = sadd.s32 %s98, 1
    %p102 = scmp.eq.s32.totalorder %s17, 1
    %p103 = scmp.ne.s32.totalorder %s98, %s100
    %p104 = scmp.eq.s32.totalorder %s17, 0
    %p105 = por %p103, %p104
    %p106 = scmp.ne.s32.totalorder %s98, %s100
    %p107 = scmp.eq.s32.totalorder %s22, 1
    %p108 = por %p106, %p107
    %p109 = scmp.ne.s32.totalorder %s100, %s101
    %p110 = scmp.eq.s32.totalorder %s22, 0
    %p111 = por %p109, %p110
    %p112 = scmp.ne.s32.totalorder %s100, %s101
    %p113 = scmp.eq.s32.totalorder %s23, 1
    %p114 = por %p112, %p113
    %p116 = scmp.ne.s32.totalorder %s101, %s115
    %p117 = scmp.eq.s32.totalorder %s23, 0
    %p118 = por %p116, %p117
    %s120 = sadd.s32 %s119, 1
    %p123 = scmp.eq.s32.totalorder %s17, 1
    %p124 = scmp.ne.s32.totalorder %s119, %s121
    %p125 = scmp.eq.s32.totalorder %s17, 0
    %p126 = por %p124, %p125
    %p127 = scmp.ne.s32.totalorder %s119, %s121
    %p128 = scmp.eq.s32.totalorder %s22, 1
    %p129 = por %p127, %p128
    %p130 = scmp.ne.s32.totalorder %s121, %s122
    %p131 = scmp.eq.s32.totalorder %s22, 0
    %p132 = por %p130, %p131
    %p133 = scmp.ne.s32.totalorder %s121, %s122
    %p134 = scmp.eq.s32.totalorder %s23, 1
    %p135 = por %p133, %p134
    %p137 = scmp.ne.s32.totalorder %s122, %s136
    %p138 = scmp.eq.s32.totalorder %s23, 0
    %p139 = por %p137, %p138
    %s141 = sadd.s32 %s140, 1
    %p144 = scmp.eq.s32.totalorder %s17, 1
    %p145 = scmp.ne.s32.totalorder %s140, %s142
    %p146 = scmp.eq.s32.totalorder %s17, 0
    %p147 = por %p145, %p146
    %p148 = scmp.ne.s32.totalorder %s140, %s142
    %p149 = scmp.eq.s32.totalorder %s22, 1
    %p150 = por %p148, %p149
    %p151 = scmp.ne.s32.totalorder %s142, %s143
    %p152 = scmp.eq.s32.totalorder %s22, 0
    %p153 = por %p151, %p152
    %p154 = scmp.ne.s32.totalorder %s142, %s143
    %p155 = scmp.eq.s32.totalorder %s23, 1
    %p156 = por %p154, %p155
    %p158 = scmp.ne.s32.totalorder %s143, %s157
    %p159 = scmp.eq.s32.totalorder %s23, 0
    %p160 = por %p158, %p159
    %s162 = sadd.s32 %s161, 1
    %p165 = scmp.eq.s32.totalorder %s17, 1
    %p166 = scmp.ne.s32.totalorder %s161, %s163
    %p167 = scmp.eq.s32.totalorder %s17, 0
    %p168 = por %p166, %p167
    %p169 = scmp.ne.s32.totalorder %s161, %s163
    %p170 = scmp.eq.s32.totalorder %s22, 1
    %p171 = por %p169, %p170
    %p172 = scmp.ne.s32.totalorder %s163, %s164
    %p173 = scmp.eq.s32.totalorder %s22, 0
    %p174 = por %p172, %p173
    %p175 = scmp.ne.s32.totalorder %s163, %s164
    %p176 = scmp.eq.s32.totalorder %s23, 1
    %p177 = por %p175, %p176
    %p179 = scmp.ne.s32.totalorder %s164, %s178
    %p180 = scmp.eq.s32.totalorder %s23, 0
    %p181 = por %p179, %p180
    %s183 = sadd.s32 %s182, 1
    %p186 = scmp.eq.s32.totalorder %s17, 1
    %p187 = scmp.ne.s32.totalorder %s182, %s184
    %p188 = scmp.eq.s32.totalorder %s17, 0
    %p189 = por %p187, %p188
    %p190 = scmp.ne.s32.totalorder %s182, %s184
    %p191 = scmp.eq.s32.totalorder %s22, 1
    %p192 = por %p190, %p191
    %p193 = scmp.ne.s32.totalorder %s184, %s185
    %p194 = scmp.eq.s32.totalorder %s22, 0
    %p195 = por %p193, %p194
    %p196 = scmp.ne.s32.totalorder %s184, %s185
    %p197 = scmp.eq.s32.totalorder %s23, 1
    %p198 = por %p196, %p197
    %p200 = scmp.ne.s32.totalorder %s185, %s199
    %p201 = scmp.eq.s32.totalorder %s23, 0
    %p202 = por %p200, %p201
    %s204 = sadd.s32 %s203, 1
    %p207 = scmp.eq.s32.totalorder %s17, 1
    %p208 = scmp.ne.s32.totalorder %s203, %s205
    %p209 = scmp.eq.s32.totalorder %s17, 0
    %p210 = por %p208, %p209
    %p211 = scmp.ne.s32.totalorder %s203, %s205
    %p212 = scmp.eq.s32.totalorder %s22, 1
    %p213 = por %p211, %p212
    %p214 = scmp.ne.s32.totalorder %s205, %s206
    %p215 = scmp.eq.s32.totalorder %s22, 0
    %p216 = por %p214, %p215
    %p217 = scmp.ne.s32.totalorder %s205, %s206
    %p218 = scmp.eq.s32.totalorder %s23, 1
    %p219 = por %p217, %p218
    %p221 = scmp.ne.s32.totalorder %s206, %s220
    %p222 = scmp.eq.s32.totalorder %s23, 0
    %p223 = por %p221, %p222
    %s225 = sadd.s32 %s224, 1
    %p228 = scmp.eq.s32.totalorder %s17, 1
    %p229 = scmp.ne.s32.totalorder %s224, %s226
    %p230 = scmp.eq.s32.totalorder %s17, 0
    %p231 = por %p229, %p230
    %p232 = scmp.ne.s32.totalorder %s224, %s226
    %p233 = scmp.eq.s32.totalorder %s22, 1
    %p234 = por %p232, %p233
    %p235 = scmp.ne.s32.totalorder %s226, %s227
    %p236 = scmp.eq.s32.totalorder %s22, 0
    %p237 = por %p235, %p236
    %p238 = scmp.ne.s32.totalorder %s226, %s227
    %p239 = scmp.eq.s32.totalorder %s23, 1
    %p240 = por %p238, %p239
    %p242 = scmp.ne.s32.totalorder %s227, %s241
    %p243 = scmp.eq.s32.totalorder %s23, 0
    %p244 = por %p242, %p243
    %s246 = sadd.s32 %s245, 1
    %p249 = scmp.eq.s32.totalorder %s17, 1
    %p250 = scmp.ne.s32.totalorder %s245, %s247
    %p251 = scmp.eq.s32.totalorder %s17, 0
    %p252 = por %p250, %p251
    %p253 = scmp.ne.s32.totalorder %s245, %s247
    %p254 = scmp.eq.s32.totalorder %s22, 1
    %p255 = por %p253, %p254
    %p256 = scmp.ne.s32.totalorder %s247, %s248
    %p257 = scmp.eq.s32.totalorder %s22, 0
    %p258 = por %p256, %p257
    %p259 = scmp.ne.s32.totalorder %s247, %s248
    %p260 = scmp.eq.s32.totalorder %s23, 1
    %p261 = por %p259, %p260
    %p263 = scmp.ne.s32.totalorder %s248, %s262
    %p264 = scmp.eq.s32.totalorder %s23, 0
    %p265 = por %p263, %p264
    %s266 = ssub.s32 %s17, %s24
    %p267 = scmp.eq.s32.totalorder %s266, 0
    %s269 = sadd.s32 %s268, 1
    %s270 = scalar_select %p267, %s268, %s269
    %p273 = pneg %p267
    %p274 = scmp.eq.s32.totalorder %s17, 1
    %p275 = por %p273, %p274
    %p276 = scmp.ne.s32.totalorder %s268, %s271
    %p277 = scmp.eq.s32.totalorder %s17, 0
    %p278 = por %p276, %p277
    %p279 = scmp.ne.s32.totalorder %s268, %s271
    %p280 = scmp.eq.s32.totalorder %s22, 1
    %p281 = por %p279, %p280
    %p282 = scmp.ne.s32.totalorder %s271, %s272
    %p283 = scmp.eq.s32.totalorder %s22, 0
    %p284 = por %p282, %p283
    %p285 = scmp.ne.s32.totalorder %s271, %s272
    %p286 = scmp.eq.s32.totalorder %s23, 1
    %p287 = por %p285, %p286
    %p289 = scmp.ne.s32.totalorder %s272, %s288
    %p290 = scmp.eq.s32.totalorder %s23, 0
    %p291 = por %p289, %p290
    %p292 = scmp.le.s32.totalorder 1, %s17
    %p293 = scmp.lt.s32.totalorder %s17, 3
    %p294 = pnand %p292, %p293
    %p295 = pneg %p294
    // Predicated region
    $region9: #{bottleneck_forward.1} parent=5 // pred_check
      _
    $region10: #{bottleneck_forward.1} parent=5 // pred_check_branch
      %297 = sbr.rel (%p294) target = $region12
    $region11: #{bottleneck_forward.1} parent=5 // pred_region
      %s298 = ssub.s32 %s17, 1
      // Predicated region
      $region13: #{bottleneck_forward.1} parent=11 // pred_check
        %p299 = pneg %p64
      $region14: #{bottleneck_forward.1} parent=11 // pred_check_branch
        %301 = sbr.rel (%p299) target = $region16
      $region15: #{bottleneck_forward.1} parent=11 // pred_region
        _
      $region16: #{bottleneck_forward.1} parent=11 // pred_fallthru
        _
      // Predicated region
      $region17: #{bottleneck_forward.1} parent=11 // pred_check
        %p302 = pneg %p111
      $region18: #{bottleneck_forward.1} parent=11 // pred_check_branch
        %304 = sbr.rel (%p302) target = $region20
      $region19: #{bottleneck_forward.1} parent=11 // pred_region
        _
      $region20: #{bottleneck_forward.1} parent=11 // pred_fallthru
        _
      // Predicated region
      $region21: #{bottleneck_forward.1} parent=11 // pred_check
        %p305 = pneg %p132
      $region22: #{bottleneck_forward.1} parent=11 // pred_check_branch
        %307 = sbr.rel (%p305) target = $region24
      $region23: #{bottleneck_forward.1} parent=11 // pred_region
        _
      $region24: #{bottleneck_forward.1} parent=11 // pred_fallthru
        _
      // Predicated region
      $region25: #{bottleneck_forward.1} parent=11 // pred_check
        %p308 = pneg %p153
      $region26: #{bottleneck_forward.1} parent=11 // pred_check_branch
        %310 = sbr.rel (%p308) target = $region28
      $region27: #{bottleneck_forward.1} parent=11 // pred_region
        _
      $region28: #{bottleneck_forward.1} parent=11 // pred_fallthru
        _
      // Predicated region
      $region29: #{bottleneck_forward.1} parent=11 // pred_check
        %p311 = pneg %p174
      $region30: #{bottleneck_forward.1} parent=11 // pred_check_branch
        %313 = sbr.rel (%p311) target = $region32
      $region31: #{bottleneck_forward.1} parent=11 // pred_region
        _
      $region32: #{bottleneck_forward.1} parent=11 // pred_fallthru
        _
      // Predicated region
      $region33: #{bottleneck_forward.1} parent=11 // pred_check
        %p314 = pneg %p195
      $region34: #{bottleneck_forward.1} parent=11 // pred_check_branch
        %316 = sbr.rel (%p314) target = $region36
      $region35: #{bottleneck_forward.1} parent=11 // pred_region
        _
      $region36: #{bottleneck_forward.1} parent=11 // pred_fallthru
        _
      // Predicated region
      $region37: #{bottleneck_forward.1} parent=11 // pred_check
        %p317 = pneg %p216
      $region38: #{bottleneck_forward.1} parent=11 // pred_check_branch
        %319 = sbr.rel (%p317) target = $region40
      $region39: #{bottleneck_forward.1} parent=11 // pred_region
        _
      $region40: #{bottleneck_forward.1} parent=11 // pred_fallthru
        _
      // Predicated region
      $region41: #{bottleneck_forward.1} parent=11 // pred_check
        %p320 = pneg %p237
      $region42: #{bottleneck_forward.1} parent=11 // pred_check_branch
        %322 = sbr.rel (%p320) target = $region44
      $region43: #{bottleneck_forward.1} parent=11 // pred_region
        _
      $region44: #{bottleneck_forward.1} parent=11 // pred_fallthru
        _
      // Predicated region
      $region45: #{bottleneck_forward.1} parent=11 // pred_check
        %p323 = pneg %p258
      $region46: #{bottleneck_forward.1} parent=11 // pred_check_branch
        %325 = sbr.rel (%p323) target = $region48
      $region47: #{bottleneck_forward.1} parent=11 // pred_region
        _
      $region48: #{bottleneck_forward.1} parent=11 // pred_fallthru
        _
    $region12: #{bottleneck_forward.1} parent=5 // pred_fallthru
      _
    %p326 = scmp.lt.s32.totalorder %s17, 2
    // Predicated region
    $region49: #{bottleneck_forward.1} parent=5 // pred_check
      %p327 = pneg %p326
    $region50: #{bottleneck_forward.1} parent=5 // pred_check_branch
      %329 = sbr.rel (%p327) target = $region52
    $region51: #{bottleneck_forward.1} parent=5 // pred_region
      // Predicated region
      $region53: #{bottleneck_forward.1} parent=51 // pred_check
        %p330 = pneg %p37
      $region54: #{bottleneck_forward.1} parent=51 // pred_check_branch
        %332 = sbr.rel (%p330) target = $region56
      $region55: #{bottleneck_forward.1} parent=51 // pred_region
        %p333 = scmp.lt.s32.totalorder %s17, 1
        %s334 = scalar_select %p333, %s17, 1
        %s335 = smul.addr %s334, 72
        %s336 = smul.addr %s335, 4
        %s337 = scalar_lea.vmem %s0, %s336
      $region56: #{bottleneck_forward.1} parent=51 // pred_fallthru
        _
      // Predicated region
      $region57: #{bottleneck_forward.1} parent=51 // pred_check
        %p338 = pneg %p84
      $region58: #{bottleneck_forward.1} parent=51 // pred_check_branch
        %340 = sbr.rel (%p338) target = $region60
      $region59: #{bottleneck_forward.1} parent=51 // pred_region
        %p341 = scmp.lt.s32.totalorder %s17, 1
        %s342 = scalar_select %p341, %s17, 1
        %s343 = smul.addr %s342, 8
        %s344 = smul.addr %s343, 4
        %s345 = scalar_lea.vmem %s2, %s344
      $region60: #{bottleneck_forward.1} parent=51 // pred_fallthru
        _
    $region52: #{bottleneck_forward.1} parent=5 // pred_fallthru
      _
    %p346 = scmp.le.s32.totalorder 1, %s17
    %p347 = scmp.lt.s32.totalorder %s17, 3
    %p348 = pnand %p346, %p347
    %p349 = pneg %p348
    // Predicated region
    $region61: #{bottleneck_forward.1} parent=5 // pred_check
      _
    $region62: #{bottleneck_forward.1} parent=5 // pred_check_branch
      %351 = sbr.rel (%p348) target = $region64
    $region63: #{bottleneck_forward.1} parent=5 // pred_region
      %s352 = ssub.s32 %s17, 1
      %p353 = scmp.lt.s32.totalorder %s22, 1
      %s354 = scalar_select %p353, %s22, 1
      %s355 = smul.addr %s354, 72
      %s356 = smul.addr %s355, 4
      %s357 = scalar_lea.vmem %s0, %s356
      %p358 = pneg %p43
      %p359 = pneg %p40
      %p360 = pneg %p64
      %p361 = pneg %p61
      %p362 = scmp.lt.s32.totalorder %s22, 1
      %s363 = scalar_select %p362, %s22, 1
      %s364 = smul.addr %s363, 8
      %s365 = smul.addr %s364, 4
      %s366 = scalar_lea.vmem %s2, %s365
      %p367 = pneg %p90
      %p368 = pneg %p87
      %p369 = pneg %p111
      %p370 = pneg %p108
      %p371 = pneg %p132
      %p372 = pneg %p129
      %p373 = pneg %p153
      %p374 = pneg %p150
      %p375 = pneg %p174
      %p376 = pneg %p171
      %p377 = pneg %p195
      %p378 = pneg %p192
      %p379 = pneg %p216
      %p380 = pneg %p213
      %p381 = pneg %p237
      %p382 = pneg %p234
      %p383 = pneg %p258
      %p384 = pneg %p255
      %p385 = pneg %p284
      %p386 = pneg %p281
      %p387 = scmp.lt.s32.totalorder %s22, 1
      %s388 = scalar_select %p387, %s22, 1
      %s389 = smul.addr %s388, 8
      %s390 = smul.addr %s389, 4
      %s391 = scalar_lea.vmem %s11, %s390
      %p392 = scmp.lt.s32.totalorder %s22, 1
      %s393 = scalar_select %p392, %s22, 1
      %s394 = smul.addr %s393, 72
      %s395 = smul.addr %s394, 4
      %s396 = scalar_lea.vmem %s0, %s395
      %p397 = scmp.lt.s32.totalorder %s22, 1
      %s398 = scalar_select %p397, %s22, 1
      %s399 = smul.addr %s398, 8
      %s400 = smul.addr %s399, 4
      %s401 = scalar_lea.vmem %s2, %s400
      %p402 = scmp.lt.s32.totalorder %s22, 1
      %s403 = scalar_select %p402, %s22, 1
      %s404 = smul.addr %s403, 8
      %s405 = smul.addr %s404, 4
      %s406 = scalar_lea.vmem %s11, %s405
      %v408 = vld [vmem:[%s396] sm:$0xf]
      %v409 = vld [vmem:[%s396 + $0x4] sm:$0xf]
      %v410 = vld [vmem:[%s396 + $0x8] sm:$0xf]
      %v411 = vld [vmem:[%s396 + $0xc] sm:$0xf]
      %v412 = vld [vmem:[%s396 + $0x10] sm:$0xf]
      %v413 = vld [vmem:[%s396 + $0x14] sm:$0xf]
      %v414 = vld [vmem:[%s396 + $0x18] sm:$0xf]
      %v415 = vld [vmem:[%s396 + $0x1c] sm:$0xf]
      %v416 = vld [vmem:[%s396 + $0x20] sm:$0xf]
      %v417 = vld [vmem:[%s396 + $0x24] sm:$0xf]
      %v418 = vld [vmem:[%s396 + $0x28] sm:$0xf]
      %v419 = vld [vmem:[%s396 + $0x2c] sm:$0xf]
      %v420 = vld [vmem:[%s396 + $0x30] sm:$0xf]
      %v421 = vld [vmem:[%s396 + $0x34] sm:$0xf]
      %v422 = vld [vmem:[%s396 + $0x38] sm:$0xf]
      %v423 = vld [vmem:[%s396 + $0x3c] sm:$0xf]
      %v424 = vld [vmem:[%s396 + $0x40] sm:$0xf]
      %v425 = vld [vmem:[%s396 + $0x44] sm:$0xf]
      %v426 = vld [vmem:[%s396 + $0x48] sm:$0xf]
      %v427 = vld [vmem:[%s396 + $0x4c] sm:$0xf]
      %v428 = vld [vmem:[%s396 + $0x50] sm:$0xf]
      %v429 = vld [vmem:[%s396 + $0x54] sm:$0xf]
      %v430 = vld [vmem:[%s396 + $0x58] sm:$0xf]
      %v431 = vld [vmem:[%s396 + $0x5c] sm:$0xf]
      %v432 = vld [vmem:[%s396 + $0x60] sm:$0xf]
      %v433 = vld [vmem:[%s396 + $0x64] sm:$0xf]
      %v434 = vld [vmem:[%s396 + $0x68] sm:$0xf]
      %v435 = vld [vmem:[%s396 + $0x6c] sm:$0xf]
      %v436 = vld [vmem:[%s396 + $0x70] sm:$0xf]
      %v437 = vld [vmem:[%s396 + $0x74] sm:$0xf]
      %v438 = vld [vmem:[%s396 + $0x78] sm:$0xf]
      %v439 = vld [vmem:[%s396 + $0x7c] sm:$0xf]
      %v440 = vld [vmem:[%s396 + $0x80] sm:$0xf]
      %v441 = vld [vmem:[%s396 + $0x84] sm:$0xf]
      %v442 = vld [vmem:[%s396 + $0x88] sm:$0xf]
      %v443 = vld [vmem:[%s396 + $0x8c] sm:$0xf]
      %v444 = vld [vmem:[%s396 + $0x90] sm:$0xf]
      %v445 = vld [vmem:[%s396 + $0x94] sm:$0xf]
      %v446 = vld [vmem:[%s396 + $0x98] sm:$0xf]
      %v447 = vld [vmem:[%s396 + $0x9c] sm:$0xf]
      %v448 = vld [vmem:[%s396 + $0xa0] sm:$0xf]
      %v449 = vld [vmem:[%s396 + $0xa4] sm:$0xf]
      %v450 = vld [vmem:[%s396 + $0xa8] sm:$0xf]
      %v451 = vld [vmem:[%s396 + $0xac] sm:$0xf]
      %v452 = vld [vmem:[%s396 + $0xb0] sm:$0xf]
      %v453 = vld [vmem:[%s396 + $0xb4] sm:$0xf]
      %v454 = vld [vmem:[%s396 + $0xb8] sm:$0xf]
      %v455 = vld [vmem:[%s396 + $0xbc] sm:$0xf]
      %v456 = vld [vmem:[%s396 + $0xc0] sm:$0xf]
      %v457 = vld [vmem:[%s396 + $0xc4] sm:$0xf]
      %v458 = vld [vmem:[%s396 + $0xc8] sm:$0xf]
      %v459 = vld [vmem:[%s396 + $0xcc] sm:$0xf]
      %v460 = vld [vmem:[%s396 + $0xd0] sm:$0xf]
      %v461 = vld [vmem:[%s396 + $0xd4] sm:$0xf]
      %v462 = vld [vmem:[%s396 + $0xd8] sm:$0xf]
      %v463 = vld [vmem:[%s396 + $0xdc] sm:$0xf]
      %v464 = vld [vmem:[%s396 + $0xe0] sm:$0xf]
      %v465 = vld [vmem:[%s396 + $0xe4] sm:$0xf]
      %v466 = vld [vmem:[%s396 + $0xe8] sm:$0xf]
      %v467 = vld [vmem:[%s396 + $0xec] sm:$0xf]
      %v468 = vld [vmem:[%s396 + $0xf0] sm:$0xf]
      %v469 = vld [vmem:[%s396 + $0xf4] sm:$0xf]
      %v470 = vld [vmem:[%s396 + $0xf8] sm:$0xf]
      %v471 = vld [vmem:[%s396 + $0xfc] sm:$0xf]
      %v472 = vld [vmem:[%s396 + $0x100] sm:$0xf]
      %v473 = vld [vmem:[%s396 + $0x104] sm:$0xf]
      %v474 = vld [vmem:[%s396 + $0x108] sm:$0xf]
      %v475 = vld [vmem:[%s396 + $0x10c] sm:$0xf]
      %v476 = vld [vmem:[%s396 + $0x110] sm:$0xf]
      %v477 = vld [vmem:[%s396 + $0x114] sm:$0xf]
      %v478 = vld [vmem:[%s396 + $0x118] sm:$0xf]
      %v479 = vld [vmem:[%s396 + $0x11c] sm:$0xf]
      %v480 = vld [vmem:[%s3] sm:$0xf]
      %v481 = vld [vmem:[%s3 + $0x4] sm:$0xf]
      %v482 = vld [vmem:[%s3 + $0x8] sm:$0xf]
      %v483 = vld [vmem:[%s3 + $0xc] sm:$0xf]
      %v484 = vld [vmem:[%s3 + $0x10] sm:$0xf]
      %v485 = vld [vmem:[%s3 + $0x14] sm:$0xf]
      %v486 = vld [vmem:[%s3 + $0x18] sm:$0xf]
      %v487 = vld [vmem:[%s3 + $0x1c] sm:$0xf]
      %v488 = vld [vmem:[%s3 + $0x20] sm:$0xf]
      %v489 = vld [vmem:[%s3 + $0x24] sm:$0xf]
      %v490 = vld [vmem:[%s3 + $0x28] sm:$0xf]
      %v491 = vld [vmem:[%s3 + $0x2c] sm:$0xf]
      %v492 = vld [vmem:[%s3 + $0x30] sm:$0xf]
      %v493 = vld [vmem:[%s3 + $0x34] sm:$0xf]
      %v494 = vld [vmem:[%s3 + $0x38] sm:$0xf]
      %v495 = vld [vmem:[%s3 + $0x3c] sm:$0xf]
      %v496 = vld [vmem:[%s4] sm:$0x1]
      %v498 = vlaneseq
      %v499 = vshrl.u32 %v498, 7
      %v500 = vsub.s32 0, %v499
      %v501 = vrot.slane %v496, %v500
      %v575 = vunpack.c.l.b16 %v408
      %v576 = vunpack.c.l.b16 %v409
      %v577 = vunpack.c.l.b16 %v410
      %v578 = vunpack.c.l.b16 %v411
      %v579 = vunpack.c.l.b16 %v412
      %v580 = vunpack.c.l.b16 %v413
      %v581 = vunpack.c.l.b16 %v414
      %v582 = vunpack.c.l.b16 %v415
      %v583 = vunpack.c.l.b16 %v416
      %v584 = vunpack.c.l.b16 %v417
      %v585 = vunpack.c.l.b16 %v418
      %v586 = vunpack.c.l.b16 %v419
      %v587 = vunpack.c.l.b16 %v420
      %v588 = vunpack.c.l.b16 %v421
      %v589 = vunpack.c.l.b16 %v422
      %v590 = vunpack.c.l.b16 %v423
      %v591 = vunpack.c.l.b16 %v424
      %v592 = vunpack.c.l.b16 %v425
      %v593 = vunpack.c.l.b16 %v426
      %v594 = vunpack.c.l.b16 %v427
      %v595 = vunpack.c.l.b16 %v428
      %v596 = vunpack.c.l.b16 %v429
      %v597 = vunpack.c.l.b16 %v430
      %v598 = vunpack.c.l.b16 %v431
      %v599 = vunpack.c.l.b16 %v432
      %v600 = vunpack.c.l.b16 %v433
      %v601 = vunpack.c.l.b16 %v434
      %v602 = vunpack.c.l.b16 %v435
      %v603 = vunpack.c.l.b16 %v436
      %v604 = vunpack.c.l.b16 %v437
      %v605 = vunpack.c.l.b16 %v438
      %v606 = vunpack.c.l.b16 %v439
      %v607 = vunpack.c.l.b16 %v440
      %v608 = vunpack.c.l.b16 %v441
      %v609 = vunpack.c.l.b16 %v442
      %v610 = vunpack.c.l.b16 %v443
      %v611 = vunpack.c.l.b16 %v444
      %v612 = vunpack.c.l.b16 %v445
      %v613 = vunpack.c.l.b16 %v446
      %v614 = vunpack.c.l.b16 %v447
      %v615 = vunpack.c.l.b16 %v448
      %v616 = vunpack.c.l.b16 %v449
      %v617 = vunpack.c.l.b16 %v450
      %v618 = vunpack.c.l.b16 %v451
      %v619 = vunpack.c.l.b16 %v452
      %v620 = vunpack.c.l.b16 %v453
      %v621 = vunpack.c.l.b16 %v454
      %v622 = vunpack.c.l.b16 %v455
      %v623 = vunpack.c.l.b16 %v456
      %v624 = vunpack.c.l.b16 %v457
      %v625 = vunpack.c.l.b16 %v458
      %v626 = vunpack.c.l.b16 %v459
      %v627 = vunpack.c.l.b16 %v460
      %v628 = vunpack.c.l.b16 %v461
      %v629 = vunpack.c.l.b16 %v462
      %v630 = vunpack.c.l.b16 %v463
      %v631 = vunpack.c.l.b16 %v464
      %v632 = vunpack.c.l.b16 %v465
      %v633 = vunpack.c.l.b16 %v466
      %v634 = vunpack.c.l.b16 %v467
      %v635 = vunpack.c.l.b16 %v468
      %v636 = vunpack.c.l.b16 %v469
      %v637 = vunpack.c.l.b16 %v470
      %v638 = vunpack.c.l.b16 %v471
      %v639 = vunpack.c.l.b16 %v472
      %v640 = vunpack.c.l.b16 %v473
      %v641 = vunpack.c.l.b16 %v474
      %v642 = vunpack.c.l.b16 %v475
      %v643 = vunpack.c.l.b16 %v476
      %v644 = vunpack.c.l.b16 %v477
      %v645 = vunpack.c.l.b16 %v478
      %v646 = vunpack.c.l.b16 %v479
      %v647 = vpack.c.b16 %v576, %v575
      %v648 = vpack.c.b16 %v578, %v577
      %v649 = vpack.c.b16 %v580, %v579
      %v650 = vpack.c.b16 %v582, %v581
      %v651 = vpack.c.b16 %v584, %v583
      %v652 = vpack.c.b16 %v586, %v585
      %v653 = vpack.c.b16 %v588, %v587
      %v654 = vpack.c.b16 %v590, %v589
      %v655 = vpack.c.b16 %v592, %v591
      %v656 = vpack.c.b16 %v594, %v593
      %v657 = vpack.c.b16 %v596, %v595
      %v658 = vpack.c.b16 %v598, %v597
      %v659 = vpack.c.b16 %v600, %v599
      %v660 = vpack.c.b16 %v602, %v601
      %v661 = vpack.c.b16 %v604, %v603
      %v662 = vpack.c.b16 %v606, %v605
      %v663 = vpack.c.b16 %v608, %v607
      %v664 = vpack.c.b16 %v610, %v609
      %v665 = vpack.c.b16 %v612, %v611
      %v666 = vpack.c.b16 %v614, %v613
      %v667 = vpack.c.b16 %v616, %v615
      %v668 = vpack.c.b16 %v618, %v617
      %v669 = vpack.c.b16 %v620, %v619
      %v670 = vpack.c.b16 %v622, %v621
      %v671 = vpack.c.b16 %v624, %v623
      %v672 = vpack.c.b16 %v626, %v625
      %v673 = vpack.c.b16 %v628, %v627
      %v674 = vpack.c.b16 %v630, %v629
      %v675 = vpack.c.b16 %v632, %v631
      %v676 = vpack.c.b16 %v634, %v633
      %v677 = vpack.c.b16 %v636, %v635
      %v678 = vpack.c.b16 %v638, %v637
      %v679 = vpack.c.b16 %v640, %v639
      %v680 = vpack.c.b16 %v642, %v641
      %v681 = vpack.c.b16 %v644, %v643
      %v682 = vpack.c.b16 %v646, %v645
      %v735 = vunpack.c.l.b16 %v480
      %v736 = vunpack.c.l.b16 %v481
      %v737 = vunpack.c.l.b16 %v482
      %v738 = vunpack.c.l.b16 %v483
      %v739 = vunpack.c.l.b16 %v484
      %v740 = vunpack.c.l.b16 %v485
      %v741 = vunpack.c.l.b16 %v486
      %v742 = vunpack.c.l.b16 %v487
      %v743 = vunpack.c.l.b16 %v488
      %v744 = vunpack.c.l.b16 %v489
      %v745 = vunpack.c.l.b16 %v490
      %v746 = vunpack.c.l.b16 %v491
      %v747 = vunpack.c.l.b16 %v492
      %v748 = vunpack.c.l.b16 %v493
      %v749 = vunpack.c.l.b16 %v494
      %v750 = vunpack.c.l.b16 %v495
      %v751 = vpack.c.b16 %v736, %v735
      %v752 = vpack.c.b16 %v738, %v737
      %v753 = vpack.c.b16 %v740, %v739
      %v754 = vpack.c.b16 %v742, %v741
      %v755 = vpack.c.b16 %v744, %v743
      %v756 = vpack.c.b16 %v746, %v745
      %v757 = vpack.c.b16 %v748, %v747
      %v758 = vpack.c.b16 %v750, %v749
      %767 = vmatprep.subr.bf16.mxu0 0
      %768 = vmatpush1.bf16.msra.mxu0 %v751
      %769 = vmatprep.subr.bf16.mxu0 0
      %770 = vmatpush1.bf16.msra.mxu0 %v752
      %771 = vmatprep.subr.bf16.mxu0 0
      %772 = vmatpush1.bf16.msra.mxu0 %v753
      %773 = vmatprep.subr.bf16.mxu0 0
      %774 = vmatpush1.bf16.msra.mxu0 %v754
      %775 = vmatprep.subr.bf16.mxu0 0
      %776 = vmatpush1.bf16.msra.mxu0 %v755
      %777 = vmatprep.subr.bf16.mxu0 0
      %778 = vmatpush1.bf16.msra.mxu0 %v756
      %779 = vmatprep.subr.bf16.mxu0 0
      %780 = vmatpush1.bf16.msra.mxu0 %v757
      %781 = vmatprep.subr.bf16.mxu0 0
      %782 = vmatpush1.bf16.msra.mxu0 %v758
      %783 = vmatprep.subr.bf16.mxu0 0
      %784 = vmatpush1.bf16.msra.mxu0 0
      %785 = vmatprep.subr.bf16.mxu0 0
      %786 = vmatpush1.bf16.msra.mxu0 0
      %787 = vmatprep.subr.bf16.mxu0 0
      %788 = vmatpush1.bf16.msra.mxu0 0
      %789 = vmatprep.subr.bf16.mxu0 0
      %790 = vmatpush1.bf16.msra.mxu0 0
      %791 = vmatprep.subr.bf16.mxu0 0
      %792 = vmatpush1.bf16.msra.mxu0 0
      %793 = vmatprep.subr.bf16.mxu0 0
      %794 = vmatpush1.bf16.msra.mxu0 0
      %795 = vmatprep.subr.bf16.mxu0 0
      %796 = vmatpush1.bf16.msra.mxu0 0
      %797 = vmatprep.subr.bf16.mxu0 0
      %798 = vmatpush1.bf16.msra.mxu0 0
      %799 = vmatprep.mubr.bf16.mxu0 0
      %800 = vmatmul.mubr.bf16.gmra.mrb[0].mxu0 %v647
      %v801 = vpop.f32.mrb[0].mxu0
      %v802 = vadd.f32 %v501, %v801
      %v803 = vpop.f32.mrb[0].mxu0
      %v804 = vpop.f32.mrb[0].mxu0
      %v805 = vadd.f32 %v501, %v804
      %v806 = vpop.f32.mrb[0].mxu0
      %807 = vmatprep.mubr.bf16.mxu0 0
      %808 = vmatmul.mubr.bf16.gmra.mrb[0].mxu0 %v648
      %v809 = vpop.f32.mrb[0].mxu0
      %v810 = vadd.f32 %v501, %v809
      %v811 = vpop.f32.mrb[0].mxu0
      %v812 = vpop.f32.mrb[0].mxu0
      %v813 = vadd.f32 %v501, %v812
      %v814 = vpop.f32.mrb[0].mxu0
      %815 = vmatprep.mubr.bf16.mxu0 0
      %816 = vmatmul.mubr.bf16.gmra.mrb[0].mxu0 %v649
      %v817 = vpop.f32.mrb[0].mxu0
      %v818 = vadd.f32 %v501, %v817
      %v819 = vpop.f32.mrb[0].mxu0
      %v820 = vpop.f32.mrb[0].mxu0
      %v821 = vadd.f32 %v501, %v820
      %v822 = vpop.f32.mrb[0].mxu0
      %823 = vmatprep.mubr.bf16.mxu0 0
      %824 = vmatmul.mubr.bf16.gmra.mrb[0].mxu0 %v650
      %v825 = vpop.f32.mrb[0].mxu0
      %v826 = vadd.f32 %v501, %v825
      %v827 = vpop.f32.mrb[0].mxu0
      %v828 = vpop.f32.mrb[0].mxu0
      %v829 = vadd.f32 %v501, %v828
      %v830 = vpop.f32.mrb[0].mxu0
      %831 = vmatprep.mubr.bf16.mxu0 0
      %832 = vmatmul.mubr.bf16.gmra.mrb[0].mxu0 %v651
      %v833 = vpop.f32.mrb[0].mxu0
      %v834 = vadd.f32 %v501, %v833
      %v835 = vpop.f32.mrb[0].mxu0
      %v836 = vpop.f32.mrb[0].mxu0
      %v837 = vadd.f32 %v501, %v836
      %v838 = vpop.f32.mrb[0].mxu0
      %839 = vmatprep.mubr.bf16.mxu0 0
      %840 = vmatmul.mubr.bf16.gmra.mrb[0].mxu0 %v652
      %v841 = vpop.f32.mrb[0].mxu0
      %v842 = vadd.f32 %v501, %v841
      %v843 = vpop.f32.mrb[0].mxu0
      %v844 = vpop.f32.mrb[0].mxu0
      %v845 = vadd.f32 %v501, %v844
      %v846 = vpop.f32.mrb[0].mxu0
      %847 = vmatprep.mubr.bf16.mxu0 0
      %848 = vmatmul.mubr.bf16.gmra.mrb[0].mxu0 %v653
      %v849 = vpop.f32.mrb[0].mxu0
      %v850 = vadd.f32 %v501, %v849
      %v851 = vpop.f32.mrb[0].mxu0
      %v852 = vpop.f32.mrb[0].mxu0
      %v853 = vadd.f32 %v501, %v852
      %v854 = vpop.f32.mrb[0].mxu0
      %855 = vmatprep.mubr.bf16.mxu0 0
      %856 = vmatmul.mubr.bf16.gmra.mrb[0].mxu0 %v654
      %v857 = vpop.f32.mrb[0].mxu0
      %v858 = vadd.f32 %v501, %v857
      %v859 = vpop.f32.mrb[0].mxu0
      %v860 = vpop.f32.mrb[0].mxu0
      %v861 = vadd.f32 %v501, %v860
      %v862 = vpop.f32.mrb[0].mxu0
      %863 = vmatprep.mubr.bf16.mxu0 0
      %864 = vmatmul.mubr.bf16.gmra.mrb[0].mxu0 %v655
      %v865 = vpop.f32.mrb[0].mxu0
      %v866 = vadd.f32 %v501, %v865
      %v867 = vpop.f32.mrb[0].mxu0
      %v868 = vpop.f32.mrb[0].mxu0
      %v869 = vadd.f32 %v501, %v868
      %v870 = vpop.f32.mrb[0].mxu0
      %871 = vmatprep.mubr.bf16.mxu0 0
      %872 = vmatmul.mubr.bf16.gmra.mrb[0].mxu0 %v656
      %v873 = vpop.f32.mrb[0].mxu0
      %v874 = vadd.f32 %v501, %v873
      %v875 = vpop.f32.mrb[0].mxu0
      %v876 = vpop.f32.mrb[0].mxu0
      %v877 = vpop.f32.mrb[0].mxu0
      %878 = vmatprep.mubr.bf16.mxu0 0
      %879 = vmatmul.mubr.bf16.gmra.mrb[0].mxu0 %v657
      %v880 = vpop.f32.mrb[0].mxu0
      %v881 = vadd.f32 %v501, %v880
      %v882 = vpop.f32.mrb[0].mxu0
      %v883 = vpop.f32.mrb[0].mxu0
      %v884 = vpop.f32.mrb[0].mxu0
      %885 = vmatprep.mubr.bf16.mxu0 0
      %886 = vmatmul.mubr.bf16.gmra.mrb[0].mxu0 %v658
      %v887 = vpop.f32.mrb[0].mxu0
      %v888 = vadd.f32 %v501, %v887
      %v889 = vpop.f32.mrb[0].mxu0
      %v890 = vpop.f32.mrb[0].mxu0
      %v891 = vpop.f32.mrb[0].mxu0
      %892 = vmatprep.mubr.bf16.mxu0 0
      %893 = vmatmul.mubr.bf16.gmra.mrb[0].mxu0 %v659
      %v894 = vpop.f32.mrb[0].mxu0
      %v895 = vadd.f32 %v501, %v894
      %v896 = vpop.f32.mrb[0].mxu0
      %v897 = vpop.f32.mrb[0].mxu0
      %v898 = vpop.f32.mrb[0].mxu0
      %899 = vmatprep.mubr.bf16.mxu0 0
      %900 = vmatmul.mubr.bf16.gmra.mrb[0].mxu0 %v660
      %v901 = vpop.f32.mrb[0].mxu0
      %v902 = vadd.f32 %v501, %v901
      %v903 = vpop.f32.mrb[0].mxu0
      %v904 = vpop.f32.mrb[0].mxu0
      %v905 = vpop.f32.mrb[0].mxu0
      %906 = vmatprep.mubr.bf16.mxu0 0
      %907 = vmatmul.mubr.bf16.gmra.mrb[0].mxu0 %v661
      %v908 = vpop.f32.mrb[0].mxu0
      %v909 = vadd.f32 %v501, %v908
      %v910 = vpop.f32.mrb[0].mxu0
      %v911 = vpop.f32.mrb[0].mxu0
      %v912 = vpop.f32.mrb[0].mxu0
      %913 = vmatprep.mubr.bf16.mxu0 0
      %914 = vmatmul.mubr.bf16.gmra.mrb[0].mxu0 %v662
      %v915 = vpop.f32.mrb[0].mxu0
      %v916 = vadd.f32 %v501, %v915
      %v917 = vpop.f32.mrb[0].mxu0
      %v918 = vpop.f32.mrb[0].mxu0
      %v919 = vpop.f32.mrb[0].mxu0
      %920 = vmatprep.mubr.bf16.mxu0 0
      %921 = vmatmul.mubr.bf16.gmra.mrb[0].mxu0 %v663
      %v922 = vpop.f32.mrb[0].mxu0
      %v923 = vadd.f32 %v501, %v922
      %v924 = vpop.f32.mrb[0].mxu0
      %v925 = vpop.f32.mrb[0].mxu0
      %v926 = vpop.f32.mrb[0].mxu0
      %927 = vmatprep.mubr.bf16.mxu0 0
      %928 = vmatmul.mubr.bf16.gmra.mrb[0].mxu0 %v664
      %v929 = vpop.f32.mrb[0].mxu0
      %v930 = vadd.f32 %v501, %v929
      %v931 = vpop.f32.mrb[0].mxu0
      %v932 = vpop.f32.mrb[0].mxu0
      %v933 = vpop.f32.mrb[0].mxu0
      %934 = vmatprep.mubr.bf16.mxu0 0
      %935 = vmatmul.mubr.bf16.gmra.mrb[0].mxu0 %v665
      %v936 = vpop.f32.mrb[0].mxu0
      %v937 = vadd.f32 %v501, %v936
      %v938 = vpop.f32.mrb[0].mxu0
      %v939 = vpop.f32.mrb[0].mxu0
      %v940 = vadd.f32 %v501, %v939
      %v941 = vpop.f32.mrb[0].mxu0
      %942 = vmatprep.mubr.bf16.mxu0 0
      %943 = vmatmul.mubr.bf16.gmra.mrb[0].mxu0 %v666
      %v944 = vpop.f32.mrb[0].mxu0
      %v945 = vadd.f32 %v501, %v944
      %v946 = vpop.f32.mrb[0].mxu0
      %v947 = vpop.f32.mrb[0].mxu0
      %v948 = vadd.f32 %v501, %v947
      %v949 = vpop.f32.mrb[0].mxu0
      %950 = vmatprep.mubr.bf16.mxu0 0
      %951 = vmatmul.mubr.bf16.gmra.mrb[0].mxu0 %v667
      %v952 = vpop.f32.mrb[0].mxu0
      %v953 = vadd.f32 %v501, %v952
      %v954 = vpop.f32.mrb[0].mxu0
      %v955 = vpop.f32.mrb[0].mxu0
      %v956 = vadd.f32 %v501, %v955
      %v957 = vpop.f32.mrb[0].mxu0
      %958 = vmatprep.mubr.bf16.mxu0 0
      %959 = vmatmul.mubr.bf16.gmra.mrb[0].mxu0 %v668
      %v960 = vpop.f32.mrb[0].mxu0
      %v961 = vadd.f32 %v501, %v960
      %v962 = vpop.f32.mrb[0].mxu0
      %v963 = vpop.f32.mrb[0].mxu0
      %v964 = vadd.f32 %v501, %v963
      %v965 = vpop.f32.mrb[0].mxu0
      %966 = vmatprep.mubr.bf16.mxu0 0
      %967 = vmatmul.mubr.bf16.gmra.mrb[0].mxu0 %v669
      %v968 = vpop.f32.mrb[0].mxu0
      %v969 = vadd.f32 %v501, %v968
      %v970 = vpop.f32.mrb[0].mxu0
      %v971 = vpop.f32.mrb[0].mxu0
      %v972 = vadd.f32 %v501, %v971
      %v973 = vpop.f32.mrb[0].mxu0
      %974 = vmatprep.mubr.bf16.mxu0 0
      %975 = vmatmul.mubr.bf16.gmra.mrb[0].mxu0 %v670
      %v976 = vpop.f32.mrb[0].mxu0
      %v977 = vadd.f32 %v501, %v976
      %v978 = vpop.f32.mrb[0].mxu0
      %v979 = vpop.f32.mrb[0].mxu0
      %v980 = vadd.f32 %v501, %v979
      %v981 = vpop.f32.mrb[0].mxu0
      %982 = vmatprep.mubr.bf16.mxu0 0
      %983 = vmatmul.mubr.bf16.gmra.mrb[0].mxu0 %v671
      %v984 = vpop.f32.mrb[0].mxu0
      %v985 = vadd.f32 %v501, %v984
      %v986 = vpop.f32.mrb[0].mxu0
      %v987 = vpop.f32.mrb[0].mxu0
      %v988 = vadd.f32 %v501, %v987
      %v989 = vpop.f32.mrb[0].mxu0
      %990 = vmatprep.mubr.bf16.mxu0 0
      %991 = vmatmul.mubr.bf16.gmra.mrb[0].mxu0 %v672
      %v992 = vpop.f32.mrb[0].mxu0
      %v993 = vadd.f32 %v501, %v992
      %v994 = vpop.f32.mrb[0].mxu0
      %v995 = vpop.f32.mrb[0].mxu0
      %v996 = vadd.f32 %v501, %v995
      %v997 = vpop.f32.mrb[0].mxu0
      %998 = vmatprep.mubr.bf16.mxu0 0
      %999 = vmatmul.mubr.bf16.gmra.mrb[0].mxu0 %v673
      %v1000 = vpop.f32.mrb[0].mxu0
      %v1001 = vpop.f32.mrb[0].mxu0
      %v1002 = vpop.f32.mrb[0].mxu0
      %v1003 = vpop.f32.mrb[0].mxu0
      %1004 = vmatprep.mubr.bf16.mxu0 0
      %1005 = vmatmul.mubr.bf16.gmra.mrb[0].mxu0 %v674
      %v1006 = vpop.f32.mrb[0].mxu0
      %v1007 = vadd.f32 %v501, %v1006
      %v1008 = vpop.f32.mrb[0].mxu0
      %v1009 = vpop.f32.mrb[0].mxu0
      %v1010 = vpop.f32.mrb[0].mxu0
      %1011 = vmatprep.mubr.bf16.mxu0 0
      %1012 = vmatmul.mubr.bf16.gmra.mrb[0].mxu0 %v675
      %v1013 = vpop.f32.mrb[0].mxu0
      %v1014 = vadd.f32 %v501, %v1013
      %v1015 = vpop.f32.mrb[0].mxu0
      %v1016 = vpop.f32.mrb[0].mxu0
      %v1017 = vpop.f32.mrb[0].mxu0
      %1018 = vmatprep.mubr.bf16.mxu0 0
      %1019 = vmatmul.mubr.bf16.gmra.mrb[0].mxu0 %v676
      %v1020 = vpop.f32.mrb[0].mxu0
      %v1021 = vadd.f32 %v501, %v1020
      %v1022 = vpop.f32.mrb[0].mxu0
      %v1023 = vpop.f32.mrb[0].mxu0
      %v1024 = vpop.f32.mrb[0].mxu0
      %1025 = vmatprep.mubr.bf16.mxu0 0
      %1026 = vmatmul.mubr.bf16.gmra.mrb[0].mxu0 %v677
      %v1027 = vpop.f32.mrb[0].mxu0
      %v1028 = vadd.f32 %v501, %v1027
      %v1029 = vpop.f32.mrb[0].mxu0
      %v1030 = vpop.f32.mrb[0].mxu0
      %v1031 = vpop.f32.mrb[0].mxu0
      %1032 = vmatprep.mubr.bf16.mxu0 0
      %1033 = vmatmul.mubr.bf16.gmra.mrb[0].mxu0 %v678
      %v1034 = vpop.f32.mrb[0].mxu0
      %v1035 = vadd.f32 %v501, %v1034
      %v1036 = vpop.f32.mrb[0].mxu0
      %v1037 = vpop.f32.mrb[0].mxu0
      %v1038 = vpop.f32.mrb[0].mxu0
      %1039 = vmatprep.mubr.bf16.mxu0 0
      %1040 = vmatmul.mubr.bf16.gmra.mrb[0].mxu0 %v679
      %v1041 = vpop.f32.mrb[0].mxu0
      %v1042 = vadd.f32 %v501, %v1041
      %v1043 = vpop.f32.mrb[0].mxu0
      %v1044 = vpop.f32.mrb[0].mxu0
      %v1045 = vpop.f32.mrb[0].mxu0
      %1046 = vmatprep.mubr.bf16.mxu0 0
      %1047 = vmatmul.mubr.bf16.gmra.mrb[0].mxu0 %v680
      %v1048 = vpop.f32.mrb[0].mxu0
      %v1049 = vadd.f32 %v501, %v1048
      %v1050 = vpop.f32.mrb[0].mxu0
      %v1051 = vpop.f32.mrb[0].mxu0
      %v1052 = vpop.f32.mrb[0].mxu0
      %1053 = vmatprep.mubr.bf16.mxu0 0
      %1054 = vmatmul.mubr.bf16.gmra.mrb[0].mxu0 %v681
      %v1055 = vpop.f32.mrb[0].mxu0
      %v1056 = vadd.f32 %v501, %v1055
      %v1057 = vpop.f32.mrb[0].mxu0
      %v1058 = vpop.f32.mrb[0].mxu0
      %v1059 = vpop.f32.mrb[0].mxu0
      %1060 = vmatprep.mubr.bf16.mxu0 0
      %1061 = vmatmul.mubr.bf16.gmra.mrb[0].mxu0 %v682
      %v1062 = vpop.f32.mrb[0].mxu0
      %v1063 = vpop.f32.mrb[0].mxu0
      %v1064 = vpop.f32.mrb[0].mxu0
      %v1065 = vpop.f32.mrb[0].mxu0
      %1066 = vdwg.mxu0
      %v1067 = vmax.f32 %v802, 0.0
      %v1068 = vmax.f32 %v805, 0.0
      %v1069 = vmax.f32 %v810, 0.0
      %v1070 = vmax.f32 %v813, 0.0
      %v1071 = vmax.f32 %v818, 0.0
      %v1072 = vmax.f32 %v821, 0.0
      %v1073 = vmax.f32 %v826, 0.0
      %v1074 = vmax.f32 %v829, 0.0
      %v1075 = vmax.f32 %v834, 0.0
      %v1076 = vmax.f32 %v837, 0.0
      %v1077 = vmax.f32 %v842, 0.0
      %v1078 = vmax.f32 %v845, 0.0
      %v1079 = vmax.f32 %v850, 0.0
      %v1080 = vmax.f32 %v853, 0.0
      %v1081 = vmax.f32 %v858, 0.0
      %v1082 = vmax.f32 %v861, 0.0
      %v1083 = vmax.f32 %v866, 0.0
      %v1084 = vmax.f32 %v869, 0.0
      %v1085 = vmax.f32 %v874, 0.0
      %v1086 = vmax.f32 %v881, 0.0
      %v1087 = vmax.f32 %v888, 0.0
      %v1088 = vmax.f32 %v895, 0.0
      %v1089 = vmax.f32 %v902, 0.0
      %v1090 = vmax.f32 %v909, 0.0
      %v1091 = vmax.f32 %v916, 0.0
      %v1092 = vmax.f32 %v923, 0.0
      %v1093 = vmax.f32 %v930, 0.0
      %v1094 = vmax.f32 %v937, 0.0
      %v1095 = vmax.f32 %v940, 0.0
      %v1096 = vmax.f32 %v945, 0.0
      %v1097 = vmax.f32 %v948, 0.0
      %v1098 = vmax.f32 %v953, 0.0
      %v1099 = vmax.f32 %v956, 0.0
      %v1100 = vmax.f32 %v961, 0.0
      %v1101 = vmax.f32 %v964, 0.0
      %v1102 = vmax.f32 %v969, 0.0
      %v1103 = vmax.f32 %v972, 0.0
      %v1104 = vmax.f32 %v977, 0.0
      %v1105 = vmax.f32 %v980, 0.0
      %v1106 = vmax.f32 %v985, 0.0
      %v1107 = vmax.f32 %v988, 0.0
      %v1108 = vmax.f32 %v993, 0.0
      %v1109 = vmax.f32 %v996, 0.0
      %v1110 = vmax.f32 %v1007, 0.0
      %v1111 = vmax.f32 %v1014, 0.0
      %v1112 = vmax.f32 %v1021, 0.0
      %v1113 = vmax.f32 %v1028, 0.0
      %v1114 = vmax.f32 %v1035, 0.0
      %v1115 = vmax.f32 %v1042, 0.0
      %v1116 = vmax.f32 %v1049, 0.0
      %v1117 = vmax.f32 %v1056, 0.0
      %v1118 = vld [vmem:[%s1] sm:$0xff]
      %v1119 = vld [vmem:[%s1 + $0x8] sm:$0xff]
      %v1120 = vld [vmem:[%s1 + $0x10] sm:$0xff]
      %v1121 = vld [vmem:[%s1 + $0x18] sm:$0xff]
      %v1122 = vld [vmem:[%s1 + $0x20] sm:$0xff]
      %v1123 = vld [vmem:[%s1 + $0x28] sm:$0xff]
      %v1124 = vld [vmem:[%s1 + $0x30] sm:$0xff]
      %v1125 = vld [vmem:[%s1 + $0x38] sm:$0xff]
      %v1126 = vld [vmem:[%s1 + $0x40] sm:$0xff]
      %v1127 = vld [vmem:[%s1 + $0x48] sm:$0xff]
      %v1128 = vld [vmem:[%s1 + $0x50] sm:$0xff]
      %v1129 = vld [vmem:[%s1 + $0x58] sm:$0xff]
      %v1130 = vld [vmem:[%s1 + $0x60] sm:$0xff]
      %v1131 = vld [vmem:[%s1 + $0x68] sm:$0xff]
      %v1132 = vld [vmem:[%s1 + $0x70] sm:$0xff]
      %v1133 = vld [vmem:[%s1 + $0x78] sm:$0xff]
      %v1134 = vld [vmem:[%s1 + $0x80] sm:$0xff]
      %v1135 = vld [vmem:[%s1 + $0x88] sm:$0xff]
      %v1136 = vld [vmem:[%s1 + $0x90] sm:$0xff]
      %v1137 = vld [vmem:[%s1 + $0xa0] sm:$0xff]
      %v1138 = vld [vmem:[%s1 + $0xb0] sm:$0xff]
      %v1139 = vld [vmem:[%s1 + $0xc0] sm:$0xff]
      %v1140 = vld [vmem:[%s1 + $0xd0] sm:$0xff]
      %v1141 = vld [vmem:[%s1 + $0xe0] sm:$0xff]
      %v1142 = vld [vmem:[%s1 + $0xf0] sm:$0xff]
      %v1143 = vld [vmem:[%s1 + $0x100] sm:$0xff]
      %v1144 = vld [vmem:[%s1 + $0x110] sm:$0xff]
      %v1145 = vld [vmem:[%s1 + $0x120] sm:$0xff]
      %v1146 = vld [vmem:[%s1 + $0x128] sm:$0xff]
      %v1147 = vld [vmem:[%s1 + $0x130] sm:$0xff]
      %v1148 = vld [vmem:[%s1 + $0x138] sm:$0xff]
      %v1149 = vld [vmem:[%s1 + $0x140] sm:$0xff]
      %v1150 = vld [vmem:[%s1 + $0x148] sm:$0xff]
      %v1151 = vld [vmem:[%s1 + $0x150] sm:$0xff]
      %v1152 = vld [vmem:[%s1 + $0x158] sm:$0xff]
      %v1153 = vld [vmem:[%s1 + $0x160] sm:$0xff]
      %v1154 = vld [vmem:[%s1 + $0x168] sm:$0xff]
      %v1155 = vld [vmem:[%s1 + $0x170] sm:$0xff]
      %v1156 = vld [vmem:[%s1 + $0x178] sm:$0xff]
      %v1157 = vld [vmem:[%s1 + $0x180] sm:$0xff]
      %v1158 = vld [vmem:[%s1 + $0x188] sm:$0xff]
      %v1159 = vld [vmem:[%s1 + $0x190] sm:$0xff]
      %v1160 = vld [vmem:[%s1 + $0x198] sm:$0xff]
      %v1161 = vld [vmem:[%s1 + $0x1b0] sm:$0xff]
      %v1162 = vld [vmem:[%s1 + $0x1c0] sm:$0xff]
      %v1163 = vld [vmem:[%s1 + $0x1d0] sm:$0xff]
      %v1164 = vld [vmem:[%s1 + $0x1e0] sm:$0xff]
      %v1165 = vld [vmem:[%s1 + $0x1f0] sm:$0xff]
      %v1166 = vld [vmem:[%s1 + $0x200] sm:$0xff]
      %v1167 = vld [vmem:[%s1 + $0x210] sm:$0xff]
      %v1168 = vld [vmem:[%s1 + $0x220] sm:$0xff]
      %1170 = vset.pattern.permute.xlu0 0
      %1171 = vperm.xlu0 %1170, %v1118
      %v1172 = vpop.permute.xlu0 %1171
      %1175 = vset.pattern.permute.xlu0 0
      %1176 = vperm.xlu0 %1175, %v1119
      %v1177 = vpop.permute.xlu0 %1176
      %1180 = vset.pattern.permute.xlu0 0
      %1181 = vperm.xlu0 %1180, %v1120
      %v1182 = vpop.permute.xlu0 %1181
      %1185 = vset.pattern.permute.xlu0 0
      %1186 = vperm.xlu0 %1185, %v1121
      %v1187 = vpop.permute.xlu0 %1186
      %1190 = vset.pattern.permute.xlu0 0
      %1191 = vperm.xlu0 %1190, %v1122
      %v1192 = vpop.permute.xlu0 %1191
      %1195 = vset.pattern.permute.xlu0 0
      %1196 = vperm.xlu0 %1195, %v1123
      %v1197 = vpop.permute.xlu0 %1196
      %1200 = vset.pattern.permute.xlu0 0
      %1201 = vperm.xlu0 %1200, %v1124
      %v1202 = vpop.permute.xlu0 %1201
      %1205 = vset.pattern.permute.xlu0 0
      %1206 = vperm.xlu0 %1205, %v1125
      %v1207 = vpop.permute.xlu0 %1206
      %1210 = vset.pattern.permute.xlu0 0
      %1211 = vperm.xlu0 %1210, %v1126
      %v1212 = vpop.permute.xlu0 %1211
      %1215 = vset.pattern.permute.xlu0 0
      %1216 = vperm.xlu0 %1215, %v1127
      %v1217 = vpop.permute.xlu0 %1216
      %1220 = vset.pattern.permute.xlu0 0
      %1221 = vperm.xlu0 %1220, %v1128
      %v1222 = vpop.permute.xlu0 %1221
      %1225 = vset.pattern.permute.xlu0 0
      %1226 = vperm.xlu0 %1225, %v1129
      %v1227 = vpop.permute.xlu0 %1226
      %1230 = vset.pattern.permute.xlu0 0
      %1231 = vperm.xlu0 %1230, %v1130
      %v1232 = vpop.permute.xlu0 %1231
      %1235 = vset.pattern.permute.xlu0 0
      %1236 = vperm.xlu0 %1235, %v1131
      %v1237 = vpop.permute.xlu0 %1236
      %1240 = vset.pattern.permute.xlu0 0
      %1241 = vperm.xlu0 %1240, %v1132
      %v1242 = vpop.permute.xlu0 %1241
      %1245 = vset.pattern.permute.xlu0 0
      %1246 = vperm.xlu0 %1245, %v1133
      %v1247 = vpop.permute.xlu0 %1246
      %1250 = vset.pattern.permute.xlu0 0
      %1251 = vperm.xlu0 %1250, %v1134
      %v1252 = vpop.permute.xlu0 %1251
      %1255 = vset.pattern.permute.xlu0 0
      %1256 = vperm.xlu0 %1255, %v1135
      %v1257 = vpop.permute.xlu0 %1256
      %1260 = vset.pattern.permute.xlu0 0
      %1261 = vperm.xlu0 %1260, %v1136
      %v1262 = vpop.permute.xlu0 %1261
      %1265 = vset.pattern.permute.xlu0 0
      %1266 = vperm.xlu0 %1265, %v1137
      %v1267 = vpop.permute.xlu0 %1266
      %1270 = vset.pattern.permute.xlu0 0
      %1271 = vperm.xlu0 %1270, %v1138
      %v1272 = vpop.permute.xlu0 %1271
      %1275 = vset.pattern.permute.xlu0 0
      %1276 = vperm.xlu0 %1275, %v1139
      %v1277 = vpop.permute.xlu0 %1276
      %1280 = vset.pattern.permute.xlu0 0
      %1281 = vperm.xlu0 %1280, %v1140
      %v1282 = vpop.permute.xlu0 %1281
      %1285 = vset.pattern.permute.xlu0 0
      %1286 = vperm.xlu0 %1285, %v1141
      %v1287 = vpop.permute.xlu0 %1286
      %1290 = vset.pattern.permute.xlu0 0
      %1291 = vperm.xlu0 %1290, %v1142
      %v1292 = vpop.permute.xlu0 %1291
      %1295 = vset.pattern.permute.xlu0 0
      %1296 = vperm.xlu0 %1295, %v1143
      %v1297 = vpop.permute.xlu0 %1296
      %1300 = vset.pattern.permute.xlu0 0
      %1301 = vperm.xlu0 %1300, %v1144
      %v1302 = vpop.permute.xlu0 %1301
      %1305 = vset.pattern.permute.xlu0 0
      %1306 = vperm.xlu0 %1305, %v1145
      %v1307 = vpop.permute.xlu0 %1306
      %1310 = vset.pattern.permute.xlu0 0
      %1311 = vperm.xlu0 %1310, %v1146
      %v1312 = vpop.permute.xlu0 %1311
      %1315 = vset.pattern.permute.xlu0 0
      %1316 = vperm.xlu0 %1315, %v1147
      %v1317 = vpop.permute.xlu0 %1316
      %1320 = vset.pattern.permute.xlu0 0
      %1321 = vperm.xlu0 %1320, %v1148
      %v1322 = vpop.permute.xlu0 %1321
      %1325 = vset.pattern.permute.xlu0 0
      %1326 = vperm.xlu0 %1325, %v1149
      %v1327 = vpop.permute.xlu0 %1326
      %1330 = vset.pattern.permute.xlu0 0
      %1331 = vperm.xlu0 %1330, %v1150
      %v1332 = vpop.permute.xlu0 %1331
      %1335 = vset.pattern.permute.xlu0 0
      %1336 = vperm.xlu0 %1335, %v1151
      %v1337 = vpop.permute.xlu0 %1336
      %1340 = vset.pattern.permute.xlu0 0
      %1341 = vperm.xlu0 %1340, %v1152
      %v1342 = vpop.permute.xlu0 %1341
      %1345 = vset.pattern.permute.xlu0 0
      %1346 = vperm.xlu0 %1345, %v1153
      %v1347 = vpop.permute.xlu0 %1346
      %1350 = vset.pattern.permute.xlu0 0
      %1351 = vperm.xlu0 %1350, %v1154
      %v1352 = vpop.permute.xlu0 %1351
      %1355 = vset.pattern.permute.xlu0 0
      %1356 = vperm.xlu0 %1355, %v1155
      %v1357 = vpop.permute.xlu0 %1356
      %1360 = vset.pattern.permute.xlu0 0
      %1361 = vperm.xlu0 %1360, %v1156
      %v1362 = vpop.permute.xlu0 %1361
      %1365 = vset.pattern.permute.xlu0 0
      %1366 = vperm.xlu0 %1365, %v1157
      %v1367 = vpop.permute.xlu0 %1366
      %1370 = vset.pattern.permute.xlu0 0
      %1371 = vperm.xlu0 %1370, %v1158
      %v1372 = vpop.permute.xlu0 %1371
      %1375 = vset.pattern.permute.xlu0 0
      %1376 = vperm.xlu0 %1375, %v1159
      %v1377 = vpop.permute.xlu0 %1376
      %1380 = vset.pattern.permute.xlu0 0
      %1381 = vperm.xlu0 %1380, %v1160
      %v1382 = vpop.permute.xlu0 %1381
      %1385 = vset.pattern.permute.xlu0 0
      %1386 = vperm.xlu0 %1385, %v1161
      %v1387 = vpop.permute.xlu0 %1386
      %1390 = vset.pattern.permute.xlu0 0
      %1391 = vperm.xlu0 %1390, %v1162
      %v1392 = vpop.permute.xlu0 %1391
      %1395 = vset.pattern.permute.xlu0 0
      %1396 = vperm.xlu0 %1395, %v1163
      %v1397 = vpop.permute.xlu0 %1396
      %1400 = vset.pattern.permute.xlu0 0
      %1401 = vperm.xlu0 %1400, %v1164
      %v1402 = vpop.permute.xlu0 %1401
      %1405 = vset.pattern.permute.xlu0 0
      %1406 = vperm.xlu0 %1405, %v1165
      %v1407 = vpop.permute.xlu0 %1406
      %1410 = vset.pattern.permute.xlu0 0
      %1411 = vperm.xlu0 %1410, %v1166
      %v1412 = vpop.permute.xlu0 %1411
      %1415 = vset.pattern.permute.xlu0 0
      %1416 = vperm.xlu0 %1415, %v1167
      %v1417 = vpop.permute.xlu0 %1416
      %1420 = vset.pattern.permute.xlu0 0
      %1421 = vperm.xlu0 %1420, %v1168
      %v1422 = vpop.permute.xlu0 %1421
      %v1424 = vmul.f32 %v1067, %v1172
      %v1425 = vmul.f32 %v1068, %v1177
      %v1426 = vmul.f32 %v1069, %v1182
      %v1427 = vmul.f32 %v1070, %v1187
      %v1428 = vmul.f32 %v1071, %v1192
      %v1429 = vmul.f32 %v1072, %v1197
      %v1430 = vmul.f32 %v1073, %v1202
      %v1431 = vmul.f32 %v1074, %v1207
      %v1432 = vmul.f32 %v1075, %v1212
      %v1433 = vmul.f32 %v1076, %v1217
      %v1434 = vmul.f32 %v1077, %v1222
      %v1435 = vmul.f32 %v1078, %v1227
      %v1436 = vmul.f32 %v1079, %v1232
      %v1437 = vmul.f32 %v1080, %v1237
      %v1438 = vmul.f32 %v1081, %v1242
      %v1439 = vmul.f32 %v1082, %v1247
      %v1440 = vmul.f32 %v1083, %v1252
      %v1441 = vmul.f32 %v1084, %v1257
      %v1442 = vmul.f32 %v1085, %v1262
      %v1443 = vmul.f32 %v1086, %v1267
      %v1444 = vmul.f32 %v1087, %v1272
      %v1445 = vmul.f32 %v1088, %v1277
      %v1446 = vmul.f32 %v1089, %v1282
      %v1447 = vmul.f32 %v1090, %v1287
      %v1448 = vmul.f32 %v1091, %v1292
      %v1449 = vmul.f32 %v1092, %v1297
      %v1450 = vmul.f32 %v1093, %v1302
      %v1451 = vmul.f32 %v1094, %v1307
      %v1452 = vmul.f32 %v1095, %v1312
      %v1453 = vmul.f32 %v1096, %v1317
      %v1454 = vmul.f32 %v1097, %v1322
      %v1455 = vmul.f32 %v1098, %v1327
      %v1456 = vmul.f32 %v1099, %v1332
      %v1457 = vmul.f32 %v1100, %v1337
      %v1458 = vmul.f32 %v1101, %v1342
      %v1459 = vmul.f32 %v1102, %v1347
      %v1460 = vmul.f32 %v1103, %v1352
      %v1461 = vmul.f32 %v1104, %v1357
      %v1462 = vmul.f32 %v1105, %v1362
      %v1463 = vmul.f32 %v1106, %v1367
      %v1464 = vmul.f32 %v1107, %v1372
      %v1465 = vmul.f32 %v1108, %v1377
      %v1466 = vmul.f32 %v1109, %v1382
      %v1467 = vmul.f32 %v1110, %v1387
      %v1468 = vmul.f32 %v1111, %v1392
      %v1469 = vmul.f32 %v1112, %v1397
      %v1470 = vmul.f32 %v1113, %v1402
      %v1471 = vmul.f32 %v1114, %v1407
      %v1472 = vmul.f32 %v1115, %v1412
      %v1473 = vmul.f32 %v1116, %v1417
      %v1474 = vmul.f32 %v1117, %v1422
      %vm1491 = vcmask 1046528
      %v1492 = vrot.slane %v1424, 1
      %v1493 = vrot.slane %v1425, 1
      %v1494 = vsel %vm1491, %v1492, %v1493
      %v1495 = vrot.slane %v1426, 1
      %v1496 = vrot.slane %v1427, 1
      %v1497 = vsel %vm1491, %v1495, %v1496
      %v1498 = vrot.slane %v1428, 1
      %v1499 = vrot.slane %v1429, 1
      %v1500 = vsel %vm1491, %v1498, %v1499
      %v1501 = vrot.slane %v1430, 1
      %v1502 = vrot.slane %v1431, 1
      %v1503 = vsel %vm1491, %v1501, %v1502
      %v1504 = vrot.slane %v1432, 1
      %v1505 = vrot.slane %v1433, 1
      %v1506 = vsel %vm1491, %v1504, %v1505
      %v1507 = vrot.slane %v1434, 1
      %v1508 = vrot.slane %v1435, 1
      %v1509 = vsel %vm1491, %v1507, %v1508
      %v1510 = vrot.slane %v1436, 1
      %v1511 = vrot.slane %v1437, 1
      %v1512 = vsel %vm1491, %v1510, %v1511
      %v1513 = vrot.slane %v1438, 1
      %v1514 = vrot.slane %v1439, 1
      %v1515 = vsel %vm1491, %v1513, %v1514
      %v1540 = vrot.slane %v1451, 1
      %v1541 = vrot.slane %v1452, 1
      %v1542 = vsel %vm1491, %v1540, %v1541
      %v1543 = vrot.slane %v1453, 1
      %v1544 = vrot.slane %v1454, 1
      %v1545 = vsel %vm1491, %v1543, %v1544
      %v1546 = vrot.slane %v1455, 1
      %v1547 = vrot.slane %v1456, 1
      %v1548 = vsel %vm1491, %v1546, %v1547
      %v1549 = vrot.slane %v1457, 1
      %v1550 = vrot.slane %v1458, 1
      %v1551 = vsel %vm1491, %v1549, %v1550
      %v1552 = vrot.slane %v1459, 1
      %v1553 = vrot.slane %v1460, 1
      %v1554 = vsel %vm1491, %v1552, %v1553
      %v1555 = vrot.slane %v1461, 1
      %v1556 = vrot.slane %v1462, 1
      %v1557 = vsel %vm1491, %v1555, %v1556
      %v1558 = vrot.slane %v1463, 1
      %v1559 = vrot.slane %v1464, 1
      %v1560 = vsel %vm1491, %v1558, %v1559
      %v1561 = vrot.slane %v1465, 1
      %v1562 = vrot.slane %v1466, 1
      %v1563 = vsel %vm1491, %v1561, %v1562
      %v1574 = vrot.slane %v1440, 1
      %v1575 = vrot.slane %v1441, 1
      %v1576 = vsel %vm1491, %v1574, %v1575
      %v1578 = vpack.c.bf16 %v1426, %v1424
      %v1579 = vpack.c.bf16 %v1443, %v1442
      %v1580 = vpack.c.bf16 %v1497, %v1494
      %v1581 = vpack.c.bf16 %v1453, %v1451
      %v1582 = vpack.c.bf16 %v1468, %v1467
      %v1583 = vpack.c.bf16 %v1545, %v1542
      %v1584 = vpack.c.bf16 %v1428, %v1426
      %v1585 = vpack.c.bf16 %v1444, %v1443
      %v1586 = vpack.c.bf16 %v1500, %v1497
      %v1587 = vpack.c.bf16 %v1430, %v1428
      %v1588 = vpack.c.bf16 %v1445, %v1444
      %v1589 = vpack.c.bf16 %v1503, %v1500
      %v1590 = vpack.c.bf16 %v1457, %v1455
      %v1591 = vpack.c.bf16 %v1470, %v1469
      %v1592 = vpack.c.bf16 %v1551, %v1548
      %v1593 = vpack.c.bf16 %v1432, %v1430
      %v1594 = vpack.c.bf16 %v1446, %v1445
      %v1595 = vpack.c.bf16 %v1506, %v1503
      %v1596 = vpack.c.bf16 %v1434, %v1432
      %v1597 = vpack.c.bf16 %v1447, %v1446
      %v1598 = vpack.c.bf16 %v1509, %v1506
      %v1599 = vpack.c.bf16 %v1461, %v1459
      %v1600 = vpack.c.bf16 %v1472, %v1471
      %v1601 = vpack.c.bf16 %v1557, %v1554
      %v1602 = vpack.c.bf16 %v1436, %v1434
      %v1603 = vpack.c.bf16 %v1448, %v1447
      %v1604 = vpack.c.bf16 %v1512, %v1509
      %v1605 = vpack.c.bf16 %v1438, %v1436
      %v1606 = vpack.c.bf16 %v1449, %v1448
      %v1607 = vpack.c.bf16 %v1515, %v1512
      %v1608 = vpack.c.bf16 %v1465, %v1463
      %v1609 = vpack.c.bf16 %v1474, %v1473
      %v1610 = vpack.c.bf16 %v1563, %v1560
      %v1611 = vpack.c.bf16 %v1440, %v1438
      %v1612 = vpack.c.bf16 %v1450, %v1449
      %v1613 = vpack.c.bf16 %v1576, %v1515
      %v1614 = vld [vmem:[%s5] sm:$0xf]
      %v1615 = vld [vmem:[%s5 + $0x4] sm:$0xf]
      %v1616 = vld [vmem:[%s5 + $0x8] sm:$0xf]
      %v1617 = vld [vmem:[%s5 + $0xc] sm:$0xf]
      %v1618 = vld [vmem:[%s5 + $0x10] sm:$0xf]
      %v1619 = vld [vmem:[%s5 + $0x14] sm:$0xf]
      %v1620 = vld [vmem:[%s5 + $0x18] sm:$0xf]
      %v1621 = vld [vmem:[%s5 + $0x1c] sm:$0xf]
      %v1622 = vld [vmem:[%s5 + $0x20] sm:$0xf]
      %v1623 = vld [vmem:[%s5 + $0x24] sm:$0xf]
      %v1624 = vld [vmem:[%s5 + $0x28] sm:$0xf]
      %v1625 = vld [vmem:[%s5 + $0x2c] sm:$0xf]
      %v1626 = vld [vmem:[%s5 + $0x30] sm:$0xf]
      %v1627 = vld [vmem:[%s5 + $0x34] sm:$0xf]
      %v1628 = vld [vmem:[%s5 + $0x38] sm:$0xf]
      %v1629 = vld [vmem:[%s5 + $0x3c] sm:$0xf]
      %v1630 = vld [vmem:[%s5 + $0x40] sm:$0xf]
      %v1631 = vld [vmem:[%s5 + $0x44] sm:$0xf]
      %v1632 = vld [vmem:[%s5 + $0x48] sm:$0xf]
      %v1633 = vld [vmem:[%s5 + $0x4c] sm:$0xf]
      %v1634 = vld [vmem:[%s5 + $0x50] sm:$0xf]
      %v1635 = vld [vmem:[%s5 + $0x54] sm:$0xf]
      %v1636 = vld [vmem:[%s5 + $0x58] sm:$0xf]
      %v1637 = vld [vmem:[%s5 + $0x5c] sm:$0xf]
      %v1638 = vld [vmem:[%s5 + $0x60] sm:$0xf]
      %v1639 = vld [vmem:[%s5 + $0x64] sm:$0xf]
      %v1640 = vld [vmem:[%s5 + $0x68] sm:$0xf]
      %v1641 = vld [vmem:[%s5 + $0x6c] sm:$0xf]
      %v1642 = vld [vmem:[%s5 + $0x70] sm:$0xf]
      %v1643 = vld [vmem:[%s5 + $0x74] sm:$0xf]
      %v1644 = vld [vmem:[%s5 + $0x78] sm:$0xf]
      %v1645 = vld [vmem:[%s5 + $0x7c] sm:$0xf]
      %v1646 = vld [vmem:[%s5 + $0x80] sm:$0xf]
      %v1647 = vld [vmem:[%s5 + $0x84] sm:$0xf]
      %v1648 = vld [vmem:[%s5 + $0x88] sm:$0xf]
      %v1649 = vld [vmem:[%s5 + $0x8c] sm:$0xf]
      %v1650 = vld [vmem:[%s5 + $0x90] sm:$0xf]
      %v1651 = vld [vmem:[%s5 + $0x94] sm:$0xf]
      %v1652 = vld [vmem:[%s5 + $0x98] sm:$0xf]
      %v1653 = vld [vmem:[%s5 + $0x9c] sm:$0xf]
      %v1654 = vld [vmem:[%s5 + $0xa0] sm:$0xf]
      %v1655 = vld [vmem:[%s5 + $0xa4] sm:$0xf]
      %v1656 = vld [vmem:[%s5 + $0xa8] sm:$0xf]
      %v1657 = vld [vmem:[%s5 + $0xac] sm:$0xf]
      %v1658 = vld [vmem:[%s5 + $0xb0] sm:$0xf]
      %v1659 = vld [vmem:[%s5 + $0xb4] sm:$0xf]
      %v1660 = vld [vmem:[%s5 + $0xb8] sm:$0xf]
      %v1661 = vld [vmem:[%s5 + $0xbc] sm:$0xf]
      %v1662 = vld [vmem:[%s5 + $0xc0] sm:$0xf]
      %v1663 = vld [vmem:[%s5 + $0xc4] sm:$0xf]
      %v1664 = vld [vmem:[%s5 + $0xc8] sm:$0xf]
      %v1665 = vld [vmem:[%s5 + $0xcc] sm:$0xf]
      %v1666 = vld [vmem:[%s5 + $0xd0] sm:$0xf]
      %v1667 = vld [vmem:[%s5 + $0xd4] sm:$0xf]
      %v1668 = vld [vmem:[%s5 + $0xd8] sm:$0xf]
      %v1669 = vld [vmem:[%s5 + $0xdc] sm:$0xf]
      %v1670 = vld [vmem:[%s5 + $0xe0] sm:$0xf]
      %v1671 = vld [vmem:[%s5 + $0xe4] sm:$0xf]
      %v1672 = vld [vmem:[%s5 + $0xe8] sm:$0xf]
      %v1673 = vld [vmem:[%s5 + $0xec] sm:$0xf]
      %v1674 = vld [vmem:[%s5 + $0xf0] sm:$0xf]
      %v1675 = vld [vmem:[%s5 + $0xf4] sm:$0xf]
      %v1676 = vld [vmem:[%s5 + $0xf8] sm:$0xf]
      %v1677 = vld [vmem:[%s5 + $0xfc] sm:$0xf]
      %v1678 = vld [vmem:[%s5 + $0x100] sm:$0xf]
      %v1679 = vld [vmem:[%s5 + $0x104] sm:$0xf]
      %v1680 = vld [vmem:[%s5 + $0x108] sm:$0xf]
      %v1681 = vld [vmem:[%s5 + $0x10c] sm:$0xf]
      %v1682 = vld [vmem:[%s5 + $0x110] sm:$0xf]
      %v1683 = vld [vmem:[%s5 + $0x114] sm:$0xf]
      %v1684 = vld [vmem:[%s5 + $0x118] sm:$0xf]
      %v1685 = vld [vmem:[%s5 + $0x11c] sm:$0xf]
      %v1686 = vld [vmem:[%s5 + $0x120] sm:$0xf]
      %v1687 = vld [vmem:[%s5 + $0x124] sm:$0xf]
      %v1688 = vld [vmem:[%s5 + $0x128] sm:$0xf]
      %v1689 = vld [vmem:[%s5 + $0x12c] sm:$0xf]
      %v1690 = vld [vmem:[%s5 + $0x130] sm:$0xf]
      %v1691 = vld [vmem:[%s5 + $0x134] sm:$0xf]
      %v1692 = vld [vmem:[%s5 + $0x138] sm:$0xf]
      %v1693 = vld [vmem:[%s5 + $0x13c] sm:$0xf]
      %v1694 = vld [vmem:[%s5 + $0x140] sm:$0xf]
      %v1695 = vld [vmem:[%s5 + $0x144] sm:$0xf]
      %v1696 = vld [vmem:[%s5 + $0x148] sm:$0xf]
      %v1697 = vld [vmem:[%s5 + $0x14c] sm:$0xf]
      %v1698 = vld [vmem:[%s5 + $0x150] sm:$0xf]
      %v1699 = vld [vmem:[%s5 + $0x154] sm:$0xf]
      %v1700 = vld [vmem:[%s5 + $0x158] sm:$0xf]
      %v1701 = vld [vmem:[%s5 + $0x15c] sm:$0xf]
      %v1702 = vld [vmem:[%s5 + $0x160] sm:$0xf]
      %v1703 = vld [vmem:[%s5 + $0x164] sm:$0xf]
      %v1704 = vld [vmem:[%s5 + $0x168] sm:$0xf]
      %v1705 = vld [vmem:[%s5 + $0x16c] sm:$0xf]
      %v1706 = vld [vmem:[%s5 + $0x170] sm:$0xf]
      %v1707 = vld [vmem:[%s5 + $0x174] sm:$0xf]
      %v1708 = vld [vmem:[%s5 + $0x178] sm:$0xf]
      %v1709 = vld [vmem:[%s5 + $0x17c] sm:$0xf]
      %v1710 = vld [vmem:[%s5 + $0x180] sm:$0xf]
      %v1711 = vld [vmem:[%s5 + $0x184] sm:$0xf]
      %v1712 = vld [vmem:[%s5 + $0x188] sm:$0xf]
      %v1713 = vld [vmem:[%s5 + $0x18c] sm:$0xf]
      %v1714 = vld [vmem:[%s5 + $0x190] sm:$0xf]
      %v1715 = vld [vmem:[%s5 + $0x194] sm:$0xf]
      %v1716 = vld [vmem:[%s5 + $0x198] sm:$0xf]
      %v1717 = vld [vmem:[%s5 + $0x19c] sm:$0xf]
      %v1718 = vld [vmem:[%s5 + $0x1a0] sm:$0xf]
      %v1719 = vld [vmem:[%s5 + $0x1a4] sm:$0xf]
      %v1720 = vld [vmem:[%s5 + $0x1a8] sm:$0xf]
      %v1721 = vld [vmem:[%s5 + $0x1ac] sm:$0xf]
      %v1722 = vld [vmem:[%s5 + $0x1b0] sm:$0xf]
      %v1723 = vld [vmem:[%s5 + $0x1b4] sm:$0xf]
      %v1724 = vld [vmem:[%s5 + $0x1b8] sm:$0xf]
      %v1725 = vld [vmem:[%s5 + $0x1bc] sm:$0xf]
      %v1726 = vld [vmem:[%s5 + $0x1c0] sm:$0xf]
      %v1727 = vld [vmem:[%s5 + $0x1c4] sm:$0xf]
      %v1728 = vld [vmem:[%s5 + $0x1c8] sm:$0xf]
      %v1729 = vld [vmem:[%s5 + $0x1cc] sm:$0xf]
      %v1730 = vld [vmem:[%s5 + $0x1d0] sm:$0xf]
      %v1731 = vld [vmem:[%s5 + $0x1d4] sm:$0xf]
      %v1732 = vld [vmem:[%s5 + $0x1d8] sm:$0xf]
      %v1733 = vld [vmem:[%s5 + $0x1dc] sm:$0xf]
      %v1734 = vld [vmem:[%s5 + $0x1e0] sm:$0xf]
      %v1735 = vld [vmem:[%s5 + $0x1e4] sm:$0xf]
      %v1736 = vld [vmem:[%s5 + $0x1e8] sm:$0xf]
      %v1737 = vld [vmem:[%s5 + $0x1ec] sm:$0xf]
      %v1738 = vld [vmem:[%s5 + $0x1f0] sm:$0xf]
      %v1739 = vld [vmem:[%s5 + $0x1f4] sm:$0xf]
      %v1740 = vld [vmem:[%s5 + $0x1f8] sm:$0xf]
      %v1741 = vld [vmem:[%s5 + $0x1fc] sm:$0xf]
      %v1742 = vld [vmem:[%s5 + $0x200] sm:$0xf]
      %v1743 = vld [vmem:[%s5 + $0x204] sm:$0xf]
      %v1744 = vld [vmem:[%s5 + $0x208] sm:$0xf]
      %v1745 = vld [vmem:[%s5 + $0x20c] sm:$0xf]
      %v1746 = vld [vmem:[%s5 + $0x210] sm:$0xf]
      %v1747 = vld [vmem:[%s5 + $0x214] sm:$0xf]
      %v1748 = vld [vmem:[%s5 + $0x218] sm:$0xf]
      %v1749 = vld [vmem:[%s5 + $0x21c] sm:$0xf]
      %v1750 = vld [vmem:[%s5 + $0x220] sm:$0xf]
      %v1751 = vld [vmem:[%s5 + $0x224] sm:$0xf]
      %v1752 = vld [vmem:[%s5 + $0x228] sm:$0xf]
      %v1753 = vld [vmem:[%s5 + $0x22c] sm:$0xf]
      %v1754 = vld [vmem:[%s5 + $0x230] sm:$0xf]
      %v1755 = vld [vmem:[%s5 + $0x234] sm:$0xf]
      %v1756 = vld [vmem:[%s5 + $0x238] sm:$0xf]
      %v1757 = vld [vmem:[%s5 + $0x23c] sm:$0xf]
      %v1758 = vld [vmem:[%s6] sm:$0x1]
      %v1760 = vlaneseq
      %v1761 = vshrl.u32 %v1760, 7
      %v1762 = vsub.s32 0, %v1761
      %v1763 = vrot.slane %v1758, %v1762
      %v1909 = vunpack.c.l.b16 %v1614
      %v1910 = vunpack.c.l.b16 %v1615
      %v1911 = vunpack.c.l.b16 %v1616
      %v1912 = vunpack.c.l.b16 %v1617
      %v1913 = vunpack.c.l.b16 %v1618
      %v1914 = vunpack.c.l.b16 %v1619
      %v1915 = vunpack.c.l.b16 %v1620
      %v1916 = vunpack.c.l.b16 %v1621
      %v1917 = vunpack.c.l.b16 %v1622
      %v1918 = vunpack.c.l.b16 %v1623
      %v1919 = vunpack.c.l.b16 %v1624
      %v1920 = vunpack.c.l.b16 %v1625
      %v1921 = vunpack.c.l.b16 %v1626
      %v1922 = vunpack.c.l.b16 %v1627
      %v1923 = vunpack.c.l.b16 %v1628
      %v1924 = vunpack.c.l.b16 %v1629
      %v1925 = vunpack.c.l.b16 %v1630
      %v1926 = vunpack.c.l.b16 %v1631
      %v1927 = vunpack.c.l.b16 %v1632
      %v1928 = vunpack.c.l.b16 %v1633
      %v1929 = vunpack.c.l.b16 %v1634
      %v1930 = vunpack.c.l.b16 %v1635
      %v1931 = vunpack.c.l.b16 %v1636
      %v1932 = vunpack.c.l.b16 %v1637
      %v1933 = vunpack.c.l.b16 %v1638
      %v1934 = vunpack.c.l.b16 %v1639
      %v1935 = vunpack.c.l.b16 %v1640
      %v1936 = vunpack.c.l.b16 %v1641
      %v1937 = vunpack.c.l.b16 %v1642
      %v1938 = vunpack.c.l.b16 %v1643
      %v1939 = vunpack.c.l.b16 %v1644
      %v1940 = vunpack.c.l.b16 %v1645
      %v1941 = vunpack.c.l.b16 %v1646
      %v1942 = vunpack.c.l.b16 %v1647
      %v1943 = vunpack.c.l.b16 %v1648
      %v1944 = vunpack.c.l.b16 %v1649
      %v1945 = vunpack.c.l.b16 %v1650
      %v1946 = vunpack.c.l.b16 %v1651
      %v1947 = vunpack.c.l.b16 %v1652
      %v1948 = vunpack.c.l.b16 %v1653
      %v1949 = vunpack.c.l.b16 %v1654
      %v1950 = vunpack.c.l.b16 %v1655
      %v1951 = vunpack.c.l.b16 %v1656
      %v1952 = vunpack.c.l.b16 %v1657
      %v1953 = vunpack.c.l.b16 %v1658
      %v1954 = vunpack.c.l.b16 %v1659
      %v1955 = vunpack.c.l.b16 %v1660
      %v1956 = vunpack.c.l.b16 %v1661
      %v1957 = vunpack.c.l.b16 %v1662
      %v1958 = vunpack.c.l.b16 %v1663
      %v1959 = vunpack.c.l.b16 %v1664
      %v1960 = vunpack.c.l.b16 %v1665
      %v1961 = vunpack.c.l.b16 %v1666
      %v1962 = vunpack.c.l.b16 %v1667
      %v1963 = vunpack.c.l.b16 %v1668
      %v1964 = vunpack.c.l.b16 %v1669
      %v1965 = vunpack.c.l.b16 %v1670
      %v1966 = vunpack.c.l.b16 %v1671
      %v1967 = vunpack.c.l.b16 %v1672
      %v1968 = vunpack.c.l.b16 %v1673
      %v1969 = vunpack.c.l.b16 %v1674
      %v1970 = vunpack.c.l.b16 %v1675
      %v1971 = vunpack.c.l.b16 %v1676
      %v1972 = vunpack.c.l.b16 %v1677
      %v1973 = vunpack.c.l.b16 %v1678
      %v1974 = vunpack.c.l.b16 %v1679
      %v1975 = vunpack.c.l.b16 %v1680
      %v1976 = vunpack.c.l.b16 %v1681
      %v1977 = vunpack.c.l.b16 %v1682
      %v1978 = vunpack.c.l.b16 %v1683
      %v1979 = vunpack.c.l.b16 %v1684
      %v1980 = vunpack.c.l.b16 %v1685
      %v1981 = vunpack.c.l.b16 %v1686
      %v1982 = vunpack.c.l.b16 %v1687
      %v1983 = vunpack.c.l.b16 %v1688
      %v1984 = vunpack.c.l.b16 %v1689
      %v1985 = vunpack.c.l.b16 %v1690
      %v1986 = vunpack.c.l.b16 %v1691
      %v1987 = vunpack.c.l.b16 %v1692
      %v1988 = vunpack.c.l.b16 %v1693
      %v1989 = vunpack.c.l.b16 %v1694
      %v1990 = vunpack.c.l.b16 %v1695
      %v1991 = vunpack.c.l.b16 %v1696
      %v1992 = vunpack.c.l.b16 %v1697
      %v1993 = vunpack.c.l.b16 %v1698
      %v1994 = vunpack.c.l.b16 %v1699
      %v1995 = vunpack.c.l.b16 %v1700
      %v1996 = vunpack.c.l.b16 %v1701
      %v1997 = vunpack.c.l.b16 %v1702
      %v1998 = vunpack.c.l.b16 %v1703
      %v1999 = vunpack.c.l.b16 %v1704
      %v2000 = vunpack.c.l.b16 %v1705
      %v2001 = vunpack.c.l.b16 %v1706
      %v2002 = vunpack.c.l.b16 %v1707
      %v2003 = vunpack.c.l.b16 %v1708
      %v2004 = vunpack.c.l.b16 %v1709
      %v2005 = vunpack.c.l.b16 %v1710
      %v2006 = vunpack.c.l.b16 %v1711
      %v2007 = vunpack.c.l.b16 %v1712
      %v2008 = vunpack.c.l.b16 %v1713
      %v2009 = vunpack.c.l.b16 %v1714
      %v2010 = vunpack.c.l.b16 %v1715
      %v2011 = vunpack.c.l.b16 %v1716
      %v2012 = vunpack.c.l.b16 %v1717
      %v2013 = vunpack.c.l.b16 %v1718
      %v2014 = vunpack.c.l.b16 %v1719
      %v2015 = vunpack.c.l.b16 %v1720
      %v2016 = vunpack.c.l.b16 %v1721
      %v2017 = vunpack.c.l.b16 %v1722
      %v2018 = vunpack.c.l.b16 %v1723
      %v2019 = vunpack.c.l.b16 %v1724
      %v2020 = vunpack.c.l.b16 %v1725
      %v2021 = vunpack.c.l.b16 %v1726
      %v2022 = vunpack.c.l.b16 %v1727
      %v2023 = vunpack.c.l.b16 %v1728
      %v2024 = vunpack.c.l.b16 %v1729
      %v2025 = vunpack.c.l.b16 %v1730
      %v2026 = vunpack.c.l.b16 %v1731
      %v2027 = vunpack.c.l.b16 %v1732
      %v2028 = vunpack.c.l.b16 %v1733
      %v2029 = vunpack.c.l.b16 %v1734
      %v2030 = vunpack.c.l.b16 %v1735
      %v2031 = vunpack.c.l.b16 %v1736
      %v2032 = vunpack.c.l.b16 %v1737
      %v2033 = vunpack.c.l.b16 %v1738
      %v2034 = vunpack.c.l.b16 %v1739
      %v2035 = vunpack.c.l.b16 %v1740
      %v2036 = vunpack.c.l.b16 %v1741
      %v2037 = vunpack.c.l.b16 %v1742
      %v2038 = vunpack.c.l.b16 %v1743
      %v2039 = vunpack.c.l.b16 %v1744
      %v2040 = vunpack.c.l.b16 %v1745
      %v2041 = vunpack.c.l.b16 %v1746
      %v2042 = vunpack.c.l.b16 %v1747
      %v2043 = vunpack.c.l.b16 %v1748
      %v2044 = vunpack.c.l.b16 %v1749
      %v2045 = vunpack.c.l.b16 %v1750
      %v2046 = vunpack.c.l.b16 %v1751
      %v2047 = vunpack.c.l.b16 %v1752
      %v2048 = vunpack.c.l.b16 %v1753
      %v2049 = vunpack.c.l.b16 %v1754
      %v2050 = vunpack.c.l.b16 %v1755
      %v2051 = vunpack.c.l.b16 %v1756
      %v2052 = vunpack.c.l.b16 %v1757
      %v2053 = vpack.c.b16 %v1910, %v1909
      %v2054 = vpack.c.b16 %v1912, %v1911
      %v2055 = vpack.c.b16 %v1914, %v1913
      %v2056 = vpack.c.b16 %v1916, %v1915
      %v2057 = vpack.c.b16 %v1918, %v1917
      %v2058 = vpack.c.b16 %v1920, %v1919
      %v2059 = vpack.c.b16 %v1922, %v1921
      %v2060 = vpack.c.b16 %v1924, %v1923
      %v2061 = vpack.c.b16 %v1926, %v1925
      %v2062 = vpack.c.b16 %v1928, %v1927
      %v2063 = vpack.c.b16 %v1930, %v1929
      %v2064 = vpack.c.b16 %v1932, %v1931
      %v2065 = vpack.c.b16 %v1934, %v1933
      %v2066 = vpack.c.b16 %v1936, %v1935
      %v2067 = vpack.c.b16 %v1938, %v1937
      %v2068 = vpack.c.b16 %v1940, %v1939
      %v2069 = vpack.c.b16 %v1942, %v1941
      %v2070 = vpack.c.b16 %v1944, %v1943
      %v2071 = vpack.c.b16 %v1946, %v1945
      %v2072 = vpack.c.b16 %v1948, %v1947
      %v2073 = vpack.c.b16 %v1950, %v1949
      %v2074 = vpack.c.b16 %v1952, %v1951
      %v2075 = vpack.c.b16 %v1954, %v1953
      %v2076 = vpack.c.b16 %v1956, %v1955
      %v2077 = vpack.c.b16 %v1958, %v1957
      %v2078 = vpack.c.b16 %v1960, %v1959
      %v2079 = vpack.c.b16 %v1962, %v1961
      %v2080 = vpack.c.b16 %v1964, %v1963
      %v2081 = vpack.c.b16 %v1966, %v1965
      %v2082 = vpack.c.b16 %v1968, %v1967
      %v2083 = vpack.c.b16 %v1970, %v1969
      %v2084 = vpack.c.b16 %v1972, %v1971
      %v2085 = vpack.c.b16 %v1974, %v1973
      %v2086 = vpack.c.b16 %v1976, %v1975
      %v2087 = vpack.c.b16 %v1978, %v1977
      %v2088 = vpack.c.b16 %v1980, %v1979
      %v2089 = vpack.c.b16 %v1982, %v1981
      %v2090 = vpack.c.b16 %v1984, %v1983
      %v2091 = vpack.c.b16 %v1986, %v1985
      %v2092 = vpack.c.b16 %v1988, %v1987
      %v2093 = vpack.c.b16 %v1990, %v1989
      %v2094 = vpack.c.b16 %v1992, %v1991
      %v2095 = vpack.c.b16 %v1994, %v1993
      %v2096 = vpack.c.b16 %v1996, %v1995
      %v2097 = vpack.c.b16 %v1998, %v1997
      %v2098 = vpack.c.b16 %v2000, %v1999
      %v2099 = vpack.c.b16 %v2002, %v2001
      %v2100 = vpack.c.b16 %v2004, %v2003
      %v2101 = vpack.c.b16 %v2006, %v2005
      %v2102 = vpack.c.b16 %v2008, %v2007
      %v2103 = vpack.c.b16 %v2010, %v2009
      %v2104 = vpack.c.b16 %v2012, %v2011
      %v2105 = vpack.c.b16 %v2014, %v2013
      %v2106 = vpack.c.b16 %v2016, %v2015
      %v2107 = vpack.c.b16 %v2018, %v2017
      %v2108 = vpack.c.b16 %v2020, %v2019
      %v2109 = vpack.c.b16 %v2022, %v2021
      %v2110 = vpack.c.b16 %v2024, %v2023
      %v2111 = vpack.c.b16 %v2026, %v2025
      %v2112 = vpack.c.b16 %v2028, %v2027
      %v2113 = vpack.c.b16 %v2030, %v2029
      %v2114 = vpack.c.b16 %v2032, %v2031
      %v2115 = vpack.c.b16 %v2034, %v2033
      %v2116 = vpack.c.b16 %v2036, %v2035
      %v2117 = vpack.c.b16 %v2038, %v2037
      %v2118 = vpack.c.b16 %v2040, %v2039
      %v2119 = vpack.c.b16 %v2042, %v2041
      %v2120 = vpack.c.b16 %v2044, %v2043
      %v2121 = vpack.c.b16 %v2046, %v2045
      %v2122 = vpack.c.b16 %v2048, %v2047
      %v2123 = vpack.c.b16 %v2050, %v2049
      %v2124 = vpack.c.b16 %v2052, %v2051
      %2197 = vmatprep.subr.bf16.mxu0 0
      %2198 = vmatpush1.bf16.msra.mxu0 %v2053
      %2199 = vmatprep.subr.bf16.mxu0 0
      %2200 = vmatpush1.bf16.msra.mxu0 %v2054
      %2201 = vmatprep.subr.bf16.mxu0 0
      %2202 = vmatpush1.bf16.msra.mxu0 %v2055
      %2203 = vmatprep.subr.bf16.mxu0 0
      %2204 = vmatpush1.bf16.msra.mxu0 %v2056
      %2205 = vmatprep.subr.bf16.mxu0 0
      %2206 = vmatpush1.bf16.msra.mxu0 %v2057
      %2207 = vmatprep.subr.bf16.mxu0 0
      %2208 = vmatpush1.bf16.msra.mxu0 %v2058
      %2209 = vmatprep.subr.bf16.mxu0 0
      %2210 = vmatpush1.bf16.msra.mxu0 %v2059
      %2211 = vmatprep.subr.bf16.mxu0 0
      %2212 = vmatpush1.bf16.msra.mxu0 %v2060
      %2213 = vmatprep.subr.bf16.mxu0 0
      %2214 = vmatpush1.bf16.msra.mxu0 %v2061
      %2215 = vmatprep.subr.bf16.mxu0 0
      %2216 = vmatpush1.bf16.msra.mxu0 %v2062
      %2217 = vmatprep.subr.bf16.mxu0 0
      %2218 = vmatpush1.bf16.msra.mxu0 %v2063
      %2219 = vmatprep.subr.bf16.mxu0 0
      %2220 = vmatpush1.bf16.msra.mxu0 %v2064
      %2221 = vmatprep.subr.bf16.mxu0 0
      %2222 = vmatpush1.bf16.msra.mxu0 %v2065
      %2223 = vmatprep.subr.bf16.mxu0 0
      %2224 = vmatpush1.bf16.msra.mxu0 %v2066
      %2225 = vmatprep.subr.bf16.mxu0 0
      %2226 = vmatpush1.bf16.msra.mxu0 %v2067
      %2227 = vmatprep.subr.bf16.mxu0 0
      %2228 = vmatpush1.bf16.msra.mxu0 %v2068
      %2229 = vmatprep.mubr.bf16.mxu0 %v1579
      %2230 = vmatmul.mubr.bf16.gmra.mrb[0].mxu0 %v1578
      %v2231 = vpop.f32.mrb[0].mxu0
      %v2232 = vadd.f32 %v1763, %v2231
      %v2233 = vpop.f32.mrb[0].mxu0
      %v2234 = vpop.f32.mrb[0].mxu0
      %v2235 = vadd.f32 %v1763, %v2234
      %v2236 = vpop.f32.mrb[0].mxu0
      %2237 = vmatprep.mubr.bf16.mxu0 %v1588
      %2238 = vmatmul.mubr.bf16.gmra.mrb[0].mxu0 %v1587
      %v2239 = vpop.f32.mrb[0].mxu0
      %v2240 = vadd.f32 %v1763, %v2239
      %v2241 = vpop.f32.mrb[0].mxu0
      %v2242 = vpop.f32.mrb[0].mxu0
      %v2243 = vadd.f32 %v1763, %v2242
      %v2244 = vpop.f32.mrb[0].mxu0
      %2245 = vmatprep.mubr.bf16.mxu0 %v1597
      %2246 = vmatmul.mubr.bf16.gmra.mrb[0].mxu0 %v1596
      %v2247 = vpop.f32.mrb[0].mxu0
      %v2248 = vadd.f32 %v1763, %v2247
      %v2249 = vpop.f32.mrb[0].mxu0
      %v2250 = vpop.f32.mrb[0].mxu0
      %v2251 = vadd.f32 %v1763, %v2250
      %v2252 = vpop.f32.mrb[0].mxu0
      %2253 = vmatprep.mubr.bf16.mxu0 %v1606
      %2254 = vmatmul.mubr.bf16.gmra.mrb[0].mxu0 %v1605
      %v2255 = vpop.f32.mrb[0].mxu0
      %v2256 = vadd.f32 %v1763, %v2255
      %v2257 = vpop.f32.mrb[0].mxu0
      %v2258 = vpop.f32.mrb[0].mxu0
      %v2259 = vadd.f32 %v1763, %v2258
      %v2260 = vpop.f32.mrb[0].mxu0
      %2261 = vdwg.mxu0
      %2262 = vmatprep.subr.bf16.mxu0 0
      %2263 = vmatpush1.bf16.msra.mxu0 %v2069
      %2264 = vmatprep.subr.bf16.mxu0 0
      %2265 = vmatpush1.bf16.msra.mxu0 %v2070
      %2266 = vmatprep.subr.bf16.mxu0 0
      %2267 = vmatpush1.bf16.msra.mxu0 %v2071
      %2268 = vmatprep.subr.bf16.mxu0 0
      %2269 = vmatpush1.bf16.msra.mxu0 %v2072
      %2270 = vmatprep.subr.bf16.mxu0 0
      %2271 = vmatpush1.bf16.msra.mxu0 %v2073
      %2272 = vmatprep.subr.bf16.mxu0 0
      %2273 = vmatpush1.bf16.msra.mxu0 %v2074
      %2274 = vmatprep.subr.bf16.mxu0 0
      %2275 = vmatpush1.bf16.msra.mxu0 %v2075
      %2276 = vmatprep.subr.bf16.mxu0 0
      %2277 = vmatpush1.bf16.msra.mxu0 %v2076
      %2278 = vmatprep.subr.bf16.mxu0 0
      %2279 = vmatpush1.bf16.msra.mxu0 %v2077
      %2280 = vmatprep.subr.bf16.mxu0 0
      %2281 = vmatpush1.bf16.msra.mxu0 %v2078
      %2282 = vmatprep.subr.bf16.mxu0 0
      %2283 = vmatpush1.bf16.msra.mxu0 %v2079
      %2284 = vmatprep.subr.bf16.mxu0 0
      %2285 = vmatpush1.bf16.msra.mxu0 %v2080
      %2286 = vmatprep.subr.bf16.mxu0 0
      %2287 = vmatpush1.bf16.msra.mxu0 %v2081
      %2288 = vmatprep.subr.bf16.mxu0 0
      %2289 = vmatpush1.bf16.msra.mxu0 %v2082
      %2290 = vmatprep.subr.bf16.mxu0 0
      %2291 = vmatpush1.bf16.msra.mxu0 %v2083
      %2292 = vmatprep.subr.bf16.mxu0 0
      %2293 = vmatpush1.bf16.msra.mxu0 %v2084
      %2294 = vmatprep.mubr.bf16.mxu0 %v1581
      %2295 = vmatmul.mubr.bf16.gmra.mrb[0].mxu0 %v1580
      %v2296 = vpop.f32.mrb[0].mxu0
      %v2297 = vadd.f32 %v2232, %v2296
      %v2298 = vpop.f32.mrb[0].mxu0
      %v2299 = vpop.f32.mrb[0].mxu0
      %v2300 = vadd.f32 %v2235, %v2299
      %v2301 = vpop.f32.mrb[0].mxu0
      %2302 = vmatprep.mubr.bf16.mxu0 %v1590
      %2303 = vmatmul.mubr.bf16.gmra.mrb[0].mxu0 %v1589
      %v2304 = vpop.f32.mrb[0].mxu0
      %v2305 = vadd.f32 %v2240, %v2304
      %v2306 = vpop.f32.mrb[0].mxu0
      %v2307 = vpop.f32.mrb[0].mxu0
      %v2308 = vadd.f32 %v2243, %v2307
      %v2309 = vpop.f32.mrb[0].mxu0
      %2310 = vmatprep.mubr.bf16.mxu0 %v1599
      %2311 = vmatmul.mubr.bf16.gmra.mrb[0].mxu0 %v1598
      %v2312 = vpop.f32.mrb[0].mxu0
      %v2313 = vadd.f32 %v2248, %v2312
      %v2314 = vpop.f32.mrb[0].mxu0
      %v2315 = vpop.f32.mrb[0].mxu0
      %v2316 = vadd.f32 %v2251, %v2315
      %v2317 = vpop.f32.mrb[0].mxu0
      %2318 = vmatprep.mubr.bf16.mxu0 %v1608
      %2319 = vmatmul.mubr.bf16.gmra.mrb[0].mxu0 %v1607
      %v2320 = vpop.f32.mrb[0].mxu0
      %v2321 = vadd.f32 %v2256, %v2320
      %v2322 = vpop.f32.mrb[0].mxu0
      %v2323 = vpop.f32.mrb[0].mxu0
      %v2324 = vadd.f32 %v2259, %v2323
      %v2325 = vpop.f32.mrb[0].mxu0
      %2326 = vdwg.mxu0
      %2327 = vmatprep.subr.bf16.mxu0 0
      %2328 = vmatpush1.bf16.msra.mxu0 %v2085
      %2329 = vmatprep.subr.bf16.mxu0 0
      %2330 = vmatpush1.bf16.msra.mxu0 %v2086
      %2331 = vmatprep.subr.bf16.mxu0 0
      %2332 = vmatpush1.bf16.msra.mxu0 %v2087
      %2333 = vmatprep.subr.bf16.mxu0 0
      %2334 = vmatpush1.bf16.msra.mxu0 %v2088
      %2335 = vmatprep.subr.bf16.mxu0 0
      %2336 = vmatpush1.bf16.msra.mxu0 %v2089
      %2337 = vmatprep.subr.bf16.mxu0 0
      %2338 = vmatpush1.bf16.msra.mxu0 %v2090
      %2339 = vmatprep.subr.bf16.mxu0 0
      %2340 = vmatpush1.bf16.msra.mxu0 %v2091
      %2341 = vmatprep.subr.bf16.mxu0 0
      %2342 = vmatpush1.bf16.msra.mxu0 %v2092
      %2343 = vmatprep.subr.bf16.mxu0 0
      %2344 = vmatpush1.bf16.msra.mxu0 %v2093
      %2345 = vmatprep.subr.bf16.mxu0 0
      %2346 = vmatpush1.bf16.msra.mxu0 %v2094
      %2347 = vmatprep.subr.bf16.mxu0 0
      %2348 = vmatpush1.bf16.msra.mxu0 %v2095
      %2349 = vmatprep.subr.bf16.mxu0 0
      %2350 = vmatpush1.bf16.msra.mxu0 %v2096
      %2351 = vmatprep.subr.bf16.mxu0 0
      %2352 = vmatpush1.bf16.msra.mxu0 %v2097
      %2353 = vmatprep.subr.bf16.mxu0 0
      %2354 = vmatpush1.bf16.msra.mxu0 %v2098
      %2355 = vmatprep.subr.bf16.mxu0 0
      %2356 = vmatpush1.bf16.msra.mxu0 %v2099
      %2357 = vmatprep.subr.bf16.mxu0 0
      %2358 = vmatpush1.bf16.msra.mxu0 %v2100
      %2359 = vmatprep.mubr.bf16.mxu0 %v1583
      %2360 = vmatmul.mubr.bf16.gmra.mrb[0].mxu0 %v1582
      %v2361 = vpop.f32.mrb[0].mxu0
      %v2362 = vadd.f32 %v2297, %v2361
      %v2363 = vpop.f32.mrb[0].mxu0
      %v2364 = vpop.f32.mrb[0].mxu0
      %v2365 = vadd.f32 %v2300, %v2364
      %v2366 = vpop.f32.mrb[0].mxu0
      %2367 = vmatprep.mubr.bf16.mxu0 %v1592
      %2368 = vmatmul.mubr.bf16.gmra.mrb[0].mxu0 %v1591
      %v2369 = vpop.f32.mrb[0].mxu0
      %v2370 = vadd.f32 %v2305, %v2369
      %v2371 = vpop.f32.mrb[0].mxu0
      %v2372 = vpop.f32.mrb[0].mxu0
      %v2373 = vadd.f32 %v2308, %v2372
      %v2374 = vpop.f32.mrb[0].mxu0
      %2375 = vmatprep.mubr.bf16.mxu0 %v1601
      %2376 = vmatmul.mubr.bf16.gmra.mrb[0].mxu0 %v1600
      %v2377 = vpop.f32.mrb[0].mxu0
      %v2378 = vadd.f32 %v2313, %v2377
      %v2379 = vpop.f32.mrb[0].mxu0
      %v2380 = vpop.f32.mrb[0].mxu0
      %v2381 = vadd.f32 %v2316, %v2380
      %v2382 = vpop.f32.mrb[0].mxu0
      %2383 = vmatprep.mubr.bf16.mxu0 %v1610
      %2384 = vmatmul.mubr.bf16.gmra.mrb[0].mxu0 %v1609
      %v2385 = vpop.f32.mrb[0].mxu0
      %v2386 = vadd.f32 %v2321, %v2385
      %v2387 = vpop.f32.mrb[0].mxu0
      %v2388 = vpop.f32.mrb[0].mxu0
      %v2389 = vadd.f32 %v2324, %v2388
      %v2390 = vpop.f32.mrb[0].mxu0
      %2391 = vdwg.mxu0
      %2392 = vmatprep.subr.bf16.mxu0 0
      %2393 = vmatpush1.bf16.msra.mxu0 %v2101
      %2394 = vmatprep.subr.bf16.mxu0 0
      %2395 = vmatpush1.bf16.msra.mxu0 %v2102
      %2396 = vmatprep.subr.bf16.mxu0 0
      %2397 = vmatpush1.bf16.msra.mxu0 %v2103
      %2398 = vmatprep.subr.bf16.mxu0 0
      %2399 = vmatpush1.bf16.msra.mxu0 %v2104
      %2400 = vmatprep.subr.bf16.mxu0 0
      %2401 = vmatpush1.bf16.msra.mxu0 %v2105
      %2402 = vmatprep.subr.bf16.mxu0 0
      %2403 = vmatpush1.bf16.msra.mxu0 %v2106
      %2404 = vmatprep.subr.bf16.mxu0 0
      %2405 = vmatpush1.bf16.msra.mxu0 %v2107
      %2406 = vmatprep.subr.bf16.mxu0 0
      %2407 = vmatpush1.bf16.msra.mxu0 %v2108
      %2408 = vmatprep.subr.bf16.mxu0 0
      %2409 = vmatpush1.bf16.msra.mxu0 %v2109
      %2410 = vmatprep.subr.bf16.mxu0 0
      %2411 = vmatpush1.bf16.msra.mxu0 %v2110
      %2412 = vmatprep.subr.bf16.mxu0 0
      %2413 = vmatpush1.bf16.msra.mxu0 %v2111
      %2414 = vmatprep.subr.bf16.mxu0 0
      %2415 = vmatpush1.bf16.msra.mxu0 %v2112
      %2416 = vmatprep.subr.bf16.mxu0 0
      %2417 = vmatpush1.bf16.msra.mxu0 %v2113
      %2418 = vmatprep.subr.bf16.mxu0 0
      %2419 = vmatpush1.bf16.msra.mxu0 %v2114
      %2420 = vmatprep.subr.bf16.mxu0 0
      %2421 = vmatpush1.bf16.msra.mxu0 %v2115
      %2422 = vmatprep.subr.bf16.mxu0 0
      %2423 = vmatpush1.bf16.msra.mxu0 %v2116
      %2424 = vmatprep.mubr.bf16.mxu0 %v1585
      %2425 = vmatmul.mubr.bf16.gmra.mrb[0].mxu0 %v1584
      %v2426 = vpop.f32.mrb[0].mxu0
      %v2427 = vadd.f32 %v2362, %v2426
      %v2428 = vpop.f32.mrb[0].mxu0
      %v2429 = vpop.f32.mrb[0].mxu0
      %v2430 = vadd.f32 %v2365, %v2429
      %v2431 = vpop.f32.mrb[0].mxu0
      %2432 = vmatprep.mubr.bf16.mxu0 %v1594
      %2433 = vmatmul.mubr.bf16.gmra.mrb[0].mxu0 %v1593
      %v2434 = vpop.f32.mrb[0].mxu0
      %v2435 = vadd.f32 %v2370, %v2434
      %v2436 = vpop.f32.mrb[0].mxu0
      %v2437 = vpop.f32.mrb[0].mxu0
      %v2438 = vadd.f32 %v2373, %v2437
      %v2439 = vpop.f32.mrb[0].mxu0
      %2440 = vmatprep.mubr.bf16.mxu0 %v1603
      %2441 = vmatmul.mubr.bf16.gmra.mrb[0].mxu0 %v1602
      %v2442 = vpop.f32.mrb[0].mxu0
      %v2443 = vadd.f32 %v2378, %v2442
      %v2444 = vpop.f32.mrb[0].mxu0
      %v2445 = vpop.f32.mrb[0].mxu0
      %v2446 = vadd.f32 %v2381, %v2445
      %v2447 = vpop.f32.mrb[0].mxu0
      %2448 = vmatprep.mubr.bf16.mxu0 %v1612
      %2449 = vmatmul.mubr.bf16.gmra.mrb[0].mxu0 %v1611
      %v2450 = vpop.f32.mrb[0].mxu0
      %v2451 = vadd.f32 %v2386, %v2450
      %v2452 = vpop.f32.mrb[0].mxu0
      %v2453 = vpop.f32.mrb[0].mxu0
      %v2454 = vadd.f32 %v2389, %v2453
      %v2455 = vpop.f32.mrb[0].mxu0
      %2456 = vdwg.mxu0
      %2457 = vmatprep.subr.bf16.mxu0 0
      %2458 = vmatpush1.bf16.msra.mxu0 %v2117
      %2459 = vmatprep.subr.bf16.mxu0 0
      %2460 = vmatpush1.bf16.msra.mxu0 %v2118
      %2461 = vmatprep.subr.bf16.mxu0 0
      %2462 = vmatpush1.bf16.msra.mxu0 %v2119
      %2463 = vmatprep.subr.bf16.mxu0 0
      %2464 = vmatpush1.bf16.msra.mxu0 %v2120
      %2465 = vmatprep.subr.bf16.mxu0 0
      %2466 = vmatpush1.bf16.msra.mxu0 %v2121
      %2467 = vmatprep.subr.bf16.mxu0 0
      %2468 = vmatpush1.bf16.msra.mxu0 %v2122
      %2469 = vmatprep.subr.bf16.mxu0 0
      %2470 = vmatpush1.bf16.msra.mxu0 %v2123
      %2471 = vmatprep.subr.bf16.mxu0 0
      %2472 = vmatpush1.bf16.msra.mxu0 %v2124
      %2473 = vmatprep.subr.bf16.mxu0 0
      %2474 = vmatpush1.bf16.msra.mxu0 0
      %2475 = vmatprep.subr.bf16.mxu0 0
      %2476 = vmatpush1.bf16.msra.mxu0 0
      %2477 = vmatprep.subr.bf16.mxu0 0
      %2478 = vmatpush1.bf16.msra.mxu0 0
      %2479 = vmatprep.subr.bf16.mxu0 0
      %2480 = vmatpush1.bf16.msra.mxu0 0
      %2481 = vmatprep.subr.bf16.mxu0 0
      %2482 = vmatpush1.bf16.msra.mxu0 0
      %2483 = vmatprep.subr.bf16.mxu0 0
      %2484 = vmatpush1.bf16.msra.mxu0 0
      %2485 = vmatprep.subr.bf16.mxu0 0
      %2486 = vmatpush1.bf16.msra.mxu0 0
      %2487 = vmatprep.subr.bf16.mxu0 0
      %2488 = vmatpush1.bf16.msra.mxu0 0
      %2489 = vmatprep.mubr.bf16.mxu0 0
      %2490 = vmatmul.mubr.bf16.gmra.mrb[0].mxu0 %v1586
      %v2491 = vpop.f32.mrb[0].mxu0
      %v2492 = vadd.f32 %v2427, %v2491
      %v2493 = vpop.f32.mrb[0].mxu0
      %v2494 = vpop.f32.mrb[0].mxu0
      %v2495 = vadd.f32 %v2430, %v2494
      %v2496 = vpop.f32.mrb[0].mxu0
      %2497 = vmatprep.mubr.bf16.mxu0 0
      %2498 = vmatmul.mubr.bf16.gmra.mrb[0].mxu0 %v1595
      %v2499 = vpop.f32.mrb[0].mxu0
      %v2500 = vadd.f32 %v2435, %v2499
      %v2501 = vpop.f32.mrb[0].mxu0
      %v2502 = vpop.f32.mrb[0].mxu0
      %v2503 = vadd.f32 %v2438, %v2502
      %v2504 = vpop.f32.mrb[0].mxu0
      %2505 = vmatprep.mubr.bf16.mxu0 0
      %2506 = vmatmul.mubr.bf16.gmra.mrb[0].mxu0 %v1604
      %v2507 = vpop.f32.mrb[0].mxu0
      %v2508 = vadd.f32 %v2443, %v2507
      %v2509 = vpop.f32.mrb[0].mxu0
      %v2510 = vpop.f32.mrb[0].mxu0
      %v2511 = vadd.f32 %v2446, %v2510
      %v2512 = vpop.f32.mrb[0].mxu0
      %2513 = vmatprep.mubr.bf16.mxu0 0
      %2514 = vmatmul.mubr.bf16.gmra.mrb[0].mxu0 %v1613
      %v2515 = vpop.f32.mrb[0].mxu0
      %v2516 = vadd.f32 %v2451, %v2515
      %v2517 = vpop.f32.mrb[0].mxu0
      %v2518 = vpop.f32.mrb[0].mxu0
      %v2519 = vadd.f32 %v2454, %v2518
      %v2520 = vpop.f32.mrb[0].mxu0
      %2521 = vdwg.mxu0
      %v2522 = vmax.f32 %v2492, 0.0
      %v2523 = vmax.f32 %v2495, 0.0
      %v2524 = vmax.f32 %v2500, 0.0
      %v2525 = vmax.f32 %v2503, 0.0
      %v2526 = vmax.f32 %v2508, 0.0
      %v2527 = vmax.f32 %v2511, 0.0
      %v2528 = vmax.f32 %v2516, 0.0
      %v2529 = vmax.f32 %v2519, 0.0
      %v2530 = vpack.c.bf16 %v2523, %v2522
      %v2531 = vpack.c.bf16 %v2525, %v2524
      %v2532 = vpack.c.bf16 %v2527, %v2526
      %v2533 = vpack.c.bf16 %v2529, %v2528
      %v2534 = vld [vmem:[%s7] sm:$0xf]
      %v2535 = vld [vmem:[%s7 + $0x4] sm:$0xf]
      %v2536 = vld [vmem:[%s7 + $0x8] sm:$0xf]
      %v2537 = vld [vmem:[%s7 + $0xc] sm:$0xf]
      %v2538 = vld [vmem:[%s7 + $0x10] sm:$0xf]
      %v2539 = vld [vmem:[%s7 + $0x14] sm:$0xf]
      %v2540 = vld [vmem:[%s7 + $0x18] sm:$0xf]
      %v2541 = vld [vmem:[%s7 + $0x1c] sm:$0xf]
      %v2542 = vld [vmem:[%s7 + $0x20] sm:$0xf]
      %v2543 = vld [vmem:[%s7 + $0x24] sm:$0xf]
      %v2544 = vld [vmem:[%s7 + $0x28] sm:$0xf]
      %v2545 = vld [vmem:[%s7 + $0x2c] sm:$0xf]
      %v2546 = vld [vmem:[%s7 + $0x30] sm:$0xf]
      %v2547 = vld [vmem:[%s7 + $0x34] sm:$0xf]
      %v2548 = vld [vmem:[%s7 + $0x38] sm:$0xf]
      %v2549 = vld [vmem:[%s7 + $0x3c] sm:$0xf]
      %v2550 = vld [vmem:[%s8] sm:$0x1]
      %v2552 = vlaneseq
      %v2553 = vshrl.u32 %v2552, 7
      %v2554 = vsub.s32 0, %v2553
      %v2555 = vrot.slane %v2550, %v2554
      %v2573 = vunpack.c.l.b16 %v2534
      %v2574 = vunpack.c.l.b16 %v2535
      %v2575 = vunpack.c.l.b16 %v2536
      %v2576 = vunpack.c.l.b16 %v2537
      %v2577 = vunpack.c.l.b16 %v2538
      %v2578 = vunpack.c.l.b16 %v2539
      %v2579 = vunpack.c.l.b16 %v2540
      %v2580 = vunpack.c.l.b16 %v2541
      %v2581 = vunpack.c.l.b16 %v2542
      %v2582 = vunpack.c.l.b16 %v2543
      %v2583 = vunpack.c.l.b16 %v2544
      %v2584 = vunpack.c.l.b16 %v2545
      %v2585 = vunpack.c.l.b16 %v2546
      %v2586 = vunpack.c.l.b16 %v2547
      %v2587 = vunpack.c.l.b16 %v2548
      %v2588 = vunpack.c.l.b16 %v2549
      %v2589 = vpack.c.b16 %v2574, %v2573
      %v2590 = vpack.c.b16 %v2576, %v2575
      %v2591 = vpack.c.b16 %v2578, %v2577
      %v2592 = vpack.c.b16 %v2580, %v2579
      %v2593 = vpack.c.b16 %v2582, %v2581
      %v2594 = vpack.c.b16 %v2584, %v2583
      %v2595 = vpack.c.b16 %v2586, %v2585
      %v2596 = vpack.c.b16 %v2588, %v2587
      %2605 = vmatprep.subr.bf16.mxu0 0
      %2606 = vmatpush1.bf16.msra.mxu0 %v2589
      %2607 = vmatprep.subr.bf16.mxu0 0
      %2608 = vmatpush1.bf16.msra.mxu0 %v2590
      %2609 = vmatprep.subr.bf16.mxu0 0
      %2610 = vmatpush1.bf16.msra.mxu0 %v2591
      %2611 = vmatprep.subr.bf16.mxu0 0
      %2612 = vmatpush1.bf16.msra.mxu0 %v2592
      %2613 = vmatprep.subr.bf16.mxu0 0
      %2614 = vmatpush1.bf16.msra.mxu0 %v2593
      %2615 = vmatprep.subr.bf16.mxu0 0
      %2616 = vmatpush1.bf16.msra.mxu0 %v2594
      %2617 = vmatprep.subr.bf16.mxu0 0
      %2618 = vmatpush1.bf16.msra.mxu0 %v2595
      %2619 = vmatprep.subr.bf16.mxu0 0
      %2620 = vmatpush1.bf16.msra.mxu0 %v2596
      %2621 = vmatprep.subr.bf16.mxu0 0
      %2622 = vmatpush1.bf16.msra.mxu0 0
      %2623 = vmatprep.subr.bf16.mxu0 0
      %2624 = vmatpush1.bf16.msra.mxu0 0
      %2625 = vmatprep.subr.bf16.mxu0 0
      %2626 = vmatpush1.bf16.msra.mxu0 0
      %2627 = vmatprep.subr.bf16.mxu0 0
      %2628 = vmatpush1.bf16.msra.mxu0 0
      %2629 = vmatprep.subr.bf16.mxu0 0
      %2630 = vmatpush1.bf16.msra.mxu0 0
      %2631 = vmatprep.subr.bf16.mxu0 0
      %2632 = vmatpush1.bf16.msra.mxu0 0
      %2633 = vmatprep.subr.bf16.mxu0 0
      %2634 = vmatpush1.bf16.msra.mxu0 0
      %2635 = vmatprep.subr.bf16.mxu0 0
      %2636 = vmatpush1.bf16.msra.mxu0 0
      %2637 = vmatprep.mubr.bf16.mxu0 0
      %2638 = vmatmul.mubr.bf16.gmra.mrb[0].mxu0 %v2530
      %v2639 = vpop.f32.mrb[0].mxu0
      %v2640 = vadd.f32 %v2555, %v2639
      %v2641 = vpop.f32.mrb[0].mxu0
      %v2642 = vpop.f32.mrb[0].mxu0
      %v2643 = vadd.f32 %v2555, %v2642
      %v2644 = vpop.f32.mrb[0].mxu0
      %2645 = vmatprep.mubr.bf16.mxu0 0
      %2646 = vmatmul.mubr.bf16.gmra.mrb[0].mxu0 %v2531
      %v2647 = vpop.f32.mrb[0].mxu0
      %v2648 = vadd.f32 %v2555, %v2647
      %v2649 = vpop.f32.mrb[0].mxu0
      %v2650 = vpop.f32.mrb[0].mxu0
      %v2651 = vadd.f32 %v2555, %v2650
      %v2652 = vpop.f32.mrb[0].mxu0
      %2653 = vmatprep.mubr.bf16.mxu0 0
      %2654 = vmatmul.mubr.bf16.gmra.mrb[0].mxu0 %v2532
      %v2655 = vpop.f32.mrb[0].mxu0
      %v2656 = vadd.f32 %v2555, %v2655
      %v2657 = vpop.f32.mrb[0].mxu0
      %v2658 = vpop.f32.mrb[0].mxu0
      %v2659 = vadd.f32 %v2555, %v2658
      %v2660 = vpop.f32.mrb[0].mxu0
      %2661 = vmatprep.mubr.bf16.mxu0 0
      %2662 = vmatmul.mubr.bf16.gmra.mrb[0].mxu0 %v2533
      %v2663 = vpop.f32.mrb[0].mxu0
      %v2664 = vadd.f32 %v2555, %v2663
      %v2665 = vpop.f32.mrb[0].mxu0
      %v2666 = vpop.f32.mrb[0].mxu0
      %v2667 = vadd.f32 %v2555, %v2666
      %v2668 = vpop.f32.mrb[0].mxu0
      %2669 = vdwg.mxu0
      %v2670 = vld [vmem:[%s401] sm:$0xf]
      %v2671 = vld [vmem:[%s401 + $0x4] sm:$0xf]
      %v2672 = vld [vmem:[%s401 + $0x8] sm:$0xf]
      %v2673 = vld [vmem:[%s401 + $0xc] sm:$0xf]
      %v2674 = vld [vmem:[%s401 + $0x10] sm:$0xf]
      %v2675 = vld [vmem:[%s401 + $0x14] sm:$0xf]
      %v2676 = vld [vmem:[%s401 + $0x18] sm:$0xf]
      %v2677 = vld [vmem:[%s401 + $0x1c] sm:$0xf]
      %v2678 = vld [vmem:[%s9] sm:$0xf]
      %v2679 = vld [vmem:[%s9 + $0x4] sm:$0xf]
      %v2680 = vld [vmem:[%s9 + $0x8] sm:$0xf]
      %v2681 = vld [vmem:[%s9 + $0xc] sm:$0xf]
      %v2682 = vld [vmem:[%s9 + $0x10] sm:$0xf]
      %v2683 = vld [vmem:[%s9 + $0x14] sm:$0xf]
      %v2684 = vld [vmem:[%s9 + $0x18] sm:$0xf]
      %v2685 = vld [vmem:[%s9 + $0x1c] sm:$0xf]
      %v2686 = vld [vmem:[%s9 + $0x20] sm:$0xf]
      %v2687 = vld [vmem:[%s9 + $0x24] sm:$0xf]
      %v2688 = vld [vmem:[%s9 + $0x28] sm:$0xf]
      %v2689 = vld [vmem:[%s9 + $0x2c] sm:$0xf]
      %v2690 = vld [vmem:[%s9 + $0x30] sm:$0xf]
      %v2691 = vld [vmem:[%s9 + $0x34] sm:$0xf]
      %v2692 = vld [vmem:[%s9 + $0x38] sm:$0xf]
      %v2693 = vld [vmem:[%s9 + $0x3c] sm:$0xf]
      %v2694 = vld [vmem:[%s10] sm:$0x1]
      %v2696 = vlaneseq
      %v2697 = vshrl.u32 %v2696, 7
      %v2698 = vsub.s32 0, %v2697
      %v2699 = vrot.slane %v2694, %v2698
      %v2709 = vunpack.c.l.b16 %v2670
      %v2710 = vunpack.c.l.b16 %v2671
      %v2711 = vunpack.c.l.b16 %v2672
      %v2712 = vunpack.c.l.b16 %v2673
      %v2713 = vunpack.c.l.b16 %v2674
      %v2714 = vunpack.c.l.b16 %v2675
      %v2715 = vunpack.c.l.b16 %v2676
      %v2716 = vunpack.c.l.b16 %v2677
      %v2717 = vpack.c.b16 %v2710, %v2709
      %v2718 = vpack.c.b16 %v2712, %v2711
      %v2719 = vpack.c.b16 %v2714, %v2713
      %v2720 = vpack.c.b16 %v2716, %v2715
      %v2741 = vunpack.c.l.b16 %v2678
      %v2742 = vunpack.c.l.b16 %v2679
      %v2743 = vunpack.c.l.b16 %v2680
      %v2744 = vunpack.c.l.b16 %v2681
      %v2745 = vunpack.c.l.b16 %v2682
      %v2746 = vunpack.c.l.b16 %v2683
      %v2747 = vunpack.c.l.b16 %v2684
      %v2748 = vunpack.c.l.b16 %v2685
      %v2749 = vunpack.c.l.b16 %v2686
      %v2750 = vunpack.c.l.b16 %v2687
      %v2751 = vunpack.c.l.b16 %v2688
      %v2752 = vunpack.c.l.b16 %v2689
      %v2753 = vunpack.c.l.b16 %v2690
      %v2754 = vunpack.c.l.b16 %v2691
      %v2755 = vunpack.c.l.b16 %v2692
      %v2756 = vunpack.c.l.b16 %v2693
      %v2757 = vpack.c.b16 %v2742, %v2741
      %v2758 = vpack.c.b16 %v2744, %v2743
      %v2759 = vpack.c.b16 %v2746, %v2745
      %v2760 = vpack.c.b16 %v2748, %v2747
      %v2761 = vpack.c.b16 %v2750, %v2749
      %v2762 = vpack.c.b16 %v2752, %v2751
      %v2763 = vpack.c.b16 %v2754, %v2753
      %v2764 = vpack.c.b16 %v2756, %v2755
      %2773 = vmatprep.subr.bf16.mxu0 0
      %2774 = vmatpush1.bf16.msra.mxu0 %v2757
      %2775 = vmatprep.subr.bf16.mxu0 0
      %2776 = vmatpush1.bf16.msra.mxu0 %v2758
      %2777 = vmatprep.subr.bf16.mxu0 0
      %2778 = vmatpush1.bf16.msra.mxu0 %v2759
      %2779 = vmatprep.subr.bf16.mxu0 0
      %2780 = vmatpush1.bf16.msra.mxu0 %v2760
      %2781 = vmatprep.subr.bf16.mxu0 0
      %2782 = vmatpush1.bf16.msra.mxu0 %v2761
      %2783 = vmatprep.subr.bf16.mxu0 0
      %2784 = vmatpush1.bf16.msra.mxu0 %v2762
      %2785 = vmatprep.subr.bf16.mxu0 0
      %2786 = vmatpush1.bf16.msra.mxu0 %v2763
      %2787 = vmatprep.subr.bf16.mxu0 0
      %2788 = vmatpush1.bf16.msra.mxu0 %v2764
      %2789 = vmatprep.subr.bf16.mxu0 0
      %2790 = vmatpush1.bf16.msra.mxu0 0
      %2791 = vmatprep.subr.bf16.mxu0 0
      %2792 = vmatpush1.bf16.msra.mxu0 0
      %2793 = vmatprep.subr.bf16.mxu0 0
      %2794 = vmatpush1.bf16.msra.mxu0 0
      %2795 = vmatprep.subr.bf16.mxu0 0
      %2796 = vmatpush1.bf16.msra.mxu0 0
      %2797 = vmatprep.subr.bf16.mxu0 0
      %2798 = vmatpush1.bf16.msra.mxu0 0
      %2799 = vmatprep.subr.bf16.mxu0 0
      %2800 = vmatpush1.bf16.msra.mxu0 0
      %2801 = vmatprep.subr.bf16.mxu0 0
      %2802 = vmatpush1.bf16.msra.mxu0 0
      %2803 = vmatprep.subr.bf16.mxu0 0
      %2804 = vmatpush1.bf16.msra.mxu0 0
      %2805 = vmatprep.mubr.bf16.mxu0 0
      %2806 = vmatmul.mubr.bf16.gmra.mrb[0].mxu0 %v2717
      %v2807 = vpop.f32.mrb[0].mxu0
      %v2808 = vadd.f32 %v2699, %v2807
      %v2809 = vpop.f32.mrb[0].mxu0
      %v2810 = vpop.f32.mrb[0].mxu0
      %v2811 = vadd.f32 %v2699, %v2810
      %v2812 = vpop.f32.mrb[0].mxu0
      %2813 = vmatprep.mubr.bf16.mxu0 0
      %2814 = vmatmul.mubr.bf16.gmra.mrb[0].mxu0 %v2718
      %v2815 = vpop.f32.mrb[0].mxu0
      %v2816 = vadd.f32 %v2699, %v2815
      %v2817 = vpop.f32.mrb[0].mxu0
      %v2818 = vpop.f32.mrb[0].mxu0
      %v2819 = vadd.f32 %v2699, %v2818
      %v2820 = vpop.f32.mrb[0].mxu0
      %2821 = vmatprep.mubr.bf16.mxu0 0
      %2822 = vmatmul.mubr.bf16.gmra.mrb[0].mxu0 %v2719
      %v2823 = vpop.f32.mrb[0].mxu0
      %v2824 = vadd.f32 %v2699, %v2823
      %v2825 = vpop.f32.mrb[0].mxu0
      %v2826 = vpop.f32.mrb[0].mxu0
      %v2827 = vadd.f32 %v2699, %v2826
      %v2828 = vpop.f32.mrb[0].mxu0
      %2829 = vmatprep.mubr.bf16.mxu0 0
      %2830 = vmatmul.mubr.bf16.gmra.mrb[0].mxu0 %v2720
      %v2831 = vpop.f32.mrb[0].mxu0
      %v2832 = vadd.f32 %v2699, %v2831
      %v2833 = vpop.f32.mrb[0].mxu0
      %v2834 = vpop.f32.mrb[0].mxu0
      %v2835 = vadd.f32 %v2699, %v2834
      %v2836 = vpop.f32.mrb[0].mxu0
      %2837 = vdwg.mxu0
      %v2838 = vadd.f32 %v2640, %v2808
      %v2839 = vadd.f32 %v2643, %v2811
      %v2840 = vadd.f32 %v2648, %v2816
      %v2841 = vadd.f32 %v2651, %v2819
      %v2842 = vadd.f32 %v2656, %v2824
      %v2843 = vadd.f32 %v2659, %v2827
      %v2844 = vadd.f32 %v2664, %v2832
      %v2845 = vadd.f32 %v2667, %v2835
      %v2846 = vmax.f32 %v2838, 0.0
      %v2847 = vmax.f32 %v2839, 0.0
      %v2848 = vmax.f32 %v2840, 0.0
      %v2849 = vmax.f32 %v2841, 0.0
      %v2850 = vmax.f32 %v2842, 0.0
      %v2851 = vmax.f32 %v2843, 0.0
      %v2852 = vmax.f32 %v2844, 0.0
      %v2853 = vmax.f32 %v2845, 0.0
      %v2854 = vpack.c.bf16 %v2847, %v2846
      %v2855 = vpack.c.bf16 %v2849, %v2848
      %v2856 = vpack.c.bf16 %v2851, %v2850
      %v2857 = vpack.c.bf16 %v2853, %v2852
      %v2862 = vunpack.c.l.b16 %v2854
      %v2863 = vunpack.c.h.b16 %v2854
      %v2864 = vunpack.c.l.b16 %v2855
      %v2865 = vunpack.c.h.b16 %v2855
      %v2866 = vunpack.c.l.b16 %v2856
      %v2867 = vunpack.c.h.b16 %v2856
      %v2868 = vunpack.c.l.b16 %v2857
      %v2869 = vunpack.c.h.b16 %v2857
      %v2870 = vpack.c.b16 %v2862, %v2862
      %v2871 = vpack.c.b16 %v2863, %v2863
      %v2872 = vpack.c.b16 %v2864, %v2864
      %v2873 = vpack.c.b16 %v2865, %v2865
      %v2874 = vpack.c.b16 %v2866, %v2866
      %v2875 = vpack.c.b16 %v2867, %v2867
      %v2876 = vpack.c.b16 %v2868, %v2868
      %v2877 = vpack.c.b16 %v2869, %v2869
      %2886 = vst [vmem:[%s406] sm:$0xf] %v2870
      %2887 = vst [vmem:[%s406 + $0x4] sm:$0xf] %v2871
      %2888 = vst [vmem:[%s406 + $0x8] sm:$0xf] %v2872
      %2889 = vst [vmem:[%s406 + $0xc] sm:$0xf] %v2873
      %2890 = vst [vmem:[%s406 + $0x10] sm:$0xf] %v2874
      %2891 = vst [vmem:[%s406 + $0x14] sm:$0xf] %v2875
      %2892 = vst [vmem:[%s406 + $0x18] sm:$0xf] %v2876
      %2893 = vst [vmem:[%s406 + $0x1c] sm:$0xf] %v2877
      %p2894 = scmp.lt.s32.totalorder %s22, 1
      %s2895 = scalar_select %p2894, %s22, 1
      %s2896 = smul.addr %s2895, 8
      %s2897 = smul.addr %s2896, 4
      %s2898 = scalar_lea.vmem %s11, %s2897
      // Predicated region
      $region65: #{bottleneck_forward.1} parent=63 // pred_check
        %p2899 = pneg %p281
      $region66: #{bottleneck_forward.1} parent=63 // pred_check_branch
        %2901 = sbr.rel (%p2899) target = $region68
      $region67: #{bottleneck_forward.1} parent=63 // pred_region
        _
      $region68: #{bottleneck_forward.1} parent=63 // pred_fallthru
        _
    $region64: #{bottleneck_forward.1} parent=5 // pred_fallthru
      _
    %p2902 = scmp.le.s32.totalorder 2, %s17
    // Predicated region
    $region69: #{bottleneck_forward.1} parent=5 // pred_check
      %p2903 = pneg %p2902
    $region70: #{bottleneck_forward.1} parent=5 // pred_check_branch
      %2905 = sbr.rel (%p2903) target = $region72
    $region71: #{bottleneck_forward.1} parent=5 // pred_region
      %s2906 = ssub.s32 %s17, 2
      // Predicated region
      $region73: #{bottleneck_forward.1} parent=71 // pred_check
        %p2907 = pneg %p287
      $region74: #{bottleneck_forward.1} parent=71 // pred_check_branch
        %2909 = sbr.rel (%p2907) target = $region76
      $region75: #{bottleneck_forward.1} parent=71 // pred_region
        %p2910 = scmp.lt.s32.totalorder %s23, 1
        %s2911 = scalar_select %p2910, %s23, 1
        %s2912 = smul.addr %s2911, 8
        %s2913 = smul.addr %s2912, 4
        %s2914 = scalar_lea.vmem %s11, %s2913
      $region76: #{bottleneck_forward.1} parent=71 // pred_fallthru
        _
    $region72: #{bottleneck_forward.1} parent=5 // pred_fallthru
      _
  $region6: #{bottleneck_forward.1} parent=0 // loop_footer
    %s21 = sadd.s32 1, %s17
  $region7: #{bottleneck_forward.1} parent=0 // loop_footer_branch
    %16 = sbr.rel target = $region3
  $region8: #{bottleneck_forward.1} parent=0 // loop_exit
    _

</llo_original>
